<compile_context>
chip_gen: v7x
topology: tpu7x:2x2x1
jax: 0.10.0
libtpu: 0.0.40
codegen_flags: <defaults>
</compile_context>

<pallas_src>
import math
import functools

import jax
import jax.numpy as jnp
import numpy as np
from jax.experimental import pallas as pl
from jax.experimental.pallas import tpu as pltpu

_LN_EPS = 1e-6  # matches the tutorial's custom LayerNormalization


def _layernorm(v, gamma, beta, eps=_LN_EPS):
    mu = jnp.mean(v, axis=-1, keepdims=True)
    var = jnp.mean((v - mu) ** 2, axis=-1, keepdims=True)
    return (v - mu) * jax.lax.rsqrt(var + eps) * gamma + beta


def _largest_divisor_leq(n, cap):
    cap = max(1, min(cap, n))
    for t in range(cap, 0, -1):
        if n % t == 0:
            return t
    return n


def encoder_block_kernel(
    x_ref, bias_ref,
    wq_ref, bq_ref, wk_ref, bk_ref, wv_ref, bv_ref, wo_ref, bo_ref,
    ln1_g_ref, ln1_b_ref,
    w1_ref, b1_ref, w2_ref, b2_ref,
    ln2_g_ref, ln2_b_ref,
    out_ref,
    k_scr, v_scr,
    *, num_heads: int, k_tile: int, ff_chunk: int,
):
    f32 = jnp.float32
    bf16 = jnp.bfloat16

    S, D = x_ref.shape                 # full-sequence view (per batch element)
    q_tile, _ = out_ref.shape          # query rows handled by this grid step
    dk = D // num_heads
    scale = 1.0 / math.sqrt(dk)

    sq = pl.program_id(1)

    ln1_g = ln1_g_ref[...].astype(f32)
    ln1_b = ln1_b_ref[...].astype(f32)

    # ---- once per batch element: cache K, V (bf16, head-split) in VMEM scratch ----
    @pl.when(sq == 0)
    def _():
        # Row-chunked so only one (q_tile, D) f32 intermediate is live at a time.
        for r in range(0, S, q_tile):
            x_r = x_ref[r:r + q_tile, :].astype(f32)
            xn_r = _layernorm(x_r, ln1_g, ln1_b).astype(bf16)
            k_r = jnp.dot(xn_r, wk_ref[...], preferred_element_type=f32) + bk_ref[...]
            k_scr[r:r + q_tile] = k_r.reshape(q_tile, num_heads, dk).astype(bf16)
            v_r = jnp.dot(xn_r, wv_ref[...], preferred_element_type=f32) + bv_ref[...]
            v_scr[r:r + q_tile] = v_r.reshape(q_tile, num_heads, dk).astype(bf16)

    # ---- per q-tile: Q projection (pre-norm), scale folded into q ----
    q_start = pl.multiple_of(sq * q_tile, q_tile)
    x_q = x_ref[pl.ds(q_start, q_tile), :].astype(f32)       # only the q rows (residual path)
    xn_q = _layernorm(x_q, ln1_g, ln1_b).astype(bf16)
    q = jnp.dot(xn_q, wq_ref[...], preferred_element_type=f32) + bq_ref[...]
    qh = (q * scale).reshape(q_tile, num_heads, dk).astype(bf16)   # (Tq, H, dk)

    # ---- key-tiled online-softmax attention (live score block is (H, Tq, Tk)) ----
    m_i = jnp.full((num_heads, q_tile, 1), -jnp.inf, f32)
    l_i = jnp.zeros((num_heads, q_tile, 1), f32)
    acc = jnp.zeros((num_heads, q_tile, dk), f32)
    for kt in range(0, S, k_tile):                             # static loop (1 iter when k_tile == S)
        kh = k_scr[kt:kt + k_tile]                             # (Tk, H, dk) bf16, cached
        vh = v_scr[kt:kt + k_tile]
        b_t = bias_ref[:, kt:kt + k_tile].astype(f32)          # (Tq, Tk) additive mask bias
        s = jnp.einsum("qhd,khd->hqk", qh, kh, preferred_element_type=f32)
        s = s + b_t[None, :, :]
        m_new = jnp.maximum(m_i, jnp.max(s, axis=-1, keepdims=True))
        alpha = jnp.exp(m_i - m_new)
        p = jnp.exp(s - m_new)
        l_i = alpha * l_i + jnp.sum(p, axis=-1, keepdims=True)
        acc = alpha * acc + jnp.einsum("hqk,khd->hqd", p.astype(bf16), vh,
                                       preferred_element_type=f32)
        m_i = m_new

    ctx = acc * pl.reciprocal(l_i, approx=True)                # (H, Tq, dk)
    ctx = jnp.swapaxes(ctx, 0, 1).reshape(q_tile, D).astype(bf16)
    attn = jnp.dot(ctx, wo_ref[...], preferred_element_type=f32) + bo_ref[...]

    x1 = x_q + attn                                            # residual #1 (dropout = identity)

    # ---- sublayer 2: pre-norm feed-forward (d_ff-chunked accumulation) ----
    xn2 = _layernorm(x1, ln2_g_ref[...].astype(f32), ln2_b_ref[...].astype(f32)).astype(bf16)
    d_ff = w1_ref.shape[1]
    ff = jnp.zeros((q_tile, D), f32)
    for c in range(0, d_ff, ff_chunk):                         # static chunk loop
        h1 = jnp.dot(xn2, w1_ref[:, c:c + ff_chunk], preferred_element_type=f32) \
             + b1_ref[:, c:c + ff_chunk]
        h1 = jnp.maximum(h1, 0.0).astype(bf16)
        ff = ff + jnp.dot(h1, w2_ref[c:c + ff_chunk, :], preferred_element_type=f32)
    ff = ff + b2_ref[...]

    out_ref[...] = (x1 + ff).astype(out_ref.dtype)             # residual #2


def encoder_block(x, src_mask, params, *, num_heads, q_tile=None, k_tile=None):
    """x: (B, S, D) f32; src_mask: (B, 1, S, S), 0 = masked, nonzero = attend."""
    B, S, D = x.shape
    d_ff = params["w1"].shape[1]
    assert D % num_heads == 0
    dk = D // num_heads

    f32, bf16 = jnp.float32, jnp.bfloat16

    # Tile sizes: largest divisors of S below the caps (never fall back to q_tile = S blindly).
    if q_tile is None or S % q_tile != 0:
        q_tile = _largest_divisor_leq(S, 256)
    if k_tile is None or S % k_tile != 0:
        k_tile = _largest_divisor_leq(S, 512)
    num_q = S // q_tile

    ff_chunk = 512 if (d_ff > 512 and d_ff % 512 == 0) else d_ff

    # Additive attention bias computed ONCE in the wrapper, shipped in bf16 (halves HBM traffic).
    bias = jnp.where(src_mask == 0, -1e9, 0.0).astype(bf16).reshape(B, S, S)

    # Weights in bf16 (halved DMA/VMEM, bf16 MXU path); biases / LN params stay f32.
    wq = params["wq"].astype(bf16); wk = params["wk"].astype(bf16)
    wv = params["wv"].astype(bf16); wo = params["wo"].astype(bf16)
    w1 = params["w1"].astype(bf16); w2 = params["w2"].astype(bf16)

    # Single resident copy in VMEM (no pipelining / no double-buffering of the weights).
    vmem_res = pl.BlockSpec(memory_space=pltpu.MemorySpace.VMEM)

    grid_spec = pltpu.PrefetchScalarGridSpec(
        num_scalar_prefetch=0,
        grid=(B, num_q),
        in_specs=[
            pl.BlockSpec((pl.Squeezed(), S, D), lambda b, sq: (b, 0, 0)),        # x (full seq, re-DMA'd once per b)
            pl.BlockSpec((pl.Squeezed(), q_tile, S), lambda b, sq: (b, sq, 0)),  # additive mask bias (bf16)
            vmem_res, vmem_res,        # wq, bq
            vmem_res, vmem_res,        # wk, bk
            vmem_res, vmem_res,        # wv, bv
            vmem_res, vmem_res,        # wo, bo
            vmem_res, vmem_res,        # ln1 gamma, beta
            vmem_res, vmem_res,        # w1, b1
            vmem_res, vmem_res,        # w2, b2
            vmem_res, vmem_res,        # ln2 gamma, beta
        ],
        out_specs=pl.BlockSpec((pl.Squeezed(), q_tile, D), lambda b, sq: (b, sq, 0)),
        scratch_shapes=[
            pltpu.VMEM((S, num_heads, dk), bf16),   # cached K (head-split)
            pltpu.VMEM((S, num_heads, dk), bf16),   # cached V (head-split)
        ],
    )

    # Per-generation VMEM budget: ~85% of the physical per-core VMEM, 64 MiB fallback.
    try:
        vmem_cap = int(pltpu.get_tpu_info().vmem_capacity_bytes)
    except Exception:
        vmem_cap = 64 * 1024 * 1024
    vmem_limit = max(32 * 1024 * 1024, int(vmem_cap * 0.85))

    flops = int(B * (8 * S * D * D + 4 * S * S * D + 4 * S * D * d_ff))
    transcendentals = int(B * num_heads * S * S)
    bytes_accessed = int(
        2 * B * S * D * 4 + B * S * S * 2           # x in/out + bf16 bias
        + (4 * D * D + 2 * D * d_ff) * 2            # bf16 weights
        + (7 * D + d_ff) * 4                        # biases + LN params
    )

    kernel = functools.partial(encoder_block_kernel, num_heads=num_heads,
                               k_tile=k_tile, ff_chunk=ff_chunk)
    return pl.pallas_call(
        kernel,
        out_shape=jax.ShapeDtypeStruct((B, S, D), x.dtype),
        grid_spec=grid_spec,
        compiler_params=pltpu.CompilerParams(
            # K/V scratch persists across q-tiles -> sq axis must be sequential ("arbitrary");
            # batch stays "parallel" so v7x's two TensorCores shard over B.
            dimension_semantics=("parallel", "arbitrary"),
            vmem_limit_bytes=vmem_limit,
        ),
        cost_estimate=pl.CostEstimate(
            flops=flops, transcendentals=transcendentals, bytes_accessed=bytes_accessed),
    )(
        x, bias,
        wq, params["bq"], wk, params["bk"], wv, params["bv"], wo, params["bo"],
        params["ln1_g"], params["ln1_b"],
        w1, params["b1"], w2, params["b2"],
        params["ln2_g"], params["ln2_b"],
    )


def init_params(key, d_model, d_ff):
    ks = jax.random.split(key, 8)
    s = 0.05
    return {
        "wq": jax.random.normal(ks[0], (d_model, d_model), jnp.float32) * s,
        "bq": jnp.zeros((1, d_model), jnp.float32),
        "wk": jax.random.normal(ks[1], (d_model, d_model), jnp.float32) * s,
        "bk": jnp.zeros((1, d_model), jnp.float32),
        "wv": jax.random.normal(ks[2], (d_model, d_model), jnp.float32) * s,
        "bv": jnp.zeros((1, d_model), jnp.float32),
        "wo": jax.random.normal(ks[3], (d_model, d_model), jnp.float32) * s,
        "bo": jnp.zeros((1, d_model), jnp.float32),
        "ln1_g": jnp.ones((1, d_model), jnp.float32),
        "ln1_b": jnp.zeros((1, d_model), jnp.float32),
        "w1": jax.random.normal(ks[4], (d_model, d_ff), jnp.float32) * s,
        "b1": jnp.zeros((1, d_ff), jnp.float32),
        "w2": jax.random.normal(ks[5], (d_ff, d_model), jnp.float32) * s,
        "b2": jnp.zeros((1, d_model), jnp.float32),
        "ln2_g": jnp.ones((1, d_model), jnp.float32),
        "ln2_b": jnp.zeros((1, d_model), jnp.float32),
    }


def encoder_block_ref(x, src_mask, params, *, num_heads):
    """Pure-JAX f32 reference mirroring the PyTorch EncoderBlock (masked_fill semantics)."""
    B, S, D = x.shape
    dk = D // num_heads

    def ln(v, g, b):
        mu = v.mean(-1, keepdims=True)
        var = ((v - mu) ** 2).mean(-1, keepdims=True)
        return (v - mu) * jax.lax.rsqrt(var + _LN_EPS) * g + b

    xn = ln(x, params["ln1_g"], params["ln1_b"])
    q = xn @ params["wq"] + params["bq"]
    k = xn @ params["wk"] + params["bk"]
    v = xn @ params["wv"] + params["bv"]
    q = q.reshape(B, S, num_heads, dk).transpose(0, 2, 1, 3)
    k = k.reshape(B, S, num_heads, dk).transpose(0, 2, 1, 3)
    v = v.reshape(B, S, num_heads, dk).transpose(0, 2, 1, 3)
    scores = (q @ k.transpose(0, 1, 3, 2)) / math.sqrt(dk)
    scores = jnp.where(src_mask == 0, -1e9, scores)
    p = jax.nn.softmax(scores, axis=-1)
    ctx = (p @ v).transpose(0, 2, 1, 3).reshape(B, S, D)
    attn = ctx @ params["wo"] + params["bo"]
    x1 = x + attn
    xn2 = ln(x1, params["ln2_g"], params["ln2_b"])
    ff = jnp.maximum(xn2 @ params["w1"] + params["b1"], 0.0) @ params["w2"] + params["b2"]
    return x1 + ff


if __name__ == "__main__":
    B, S, D, H, DFF = 2, 8, 32, 4, 64

    key = jax.random.PRNGKey(0)
    kx, kp = jax.random.split(key)
    x = jax.random.normal(kx, (B, S, D), jnp.float32)
    # src_mask: 1 = attend, 0 = masked; mask out the last two key positions for batch 1.
    mask = jnp.ones((B, 1, S, S), jnp.float32)
    mask = mask.at[1, :, :, -2:].set(0.0)

    params = init_params(kp, D, DFF)

    out = encoder_block(x, mask, params, num_heads=H)
    jax.block_until_ready(out)
    assert out.shape == (B, S, D)
    assert jnp.all(jnp.isfinite(out))

    ref = encoder_block_ref(x, mask, params, num_heads=H)
    np.testing.assert_allclose(np.asarray(out), np.asarray(ref), rtol=3e-2, atol=3e-2)
    print("KERNEL_OK")
</pallas_src>

<mosaic_0001>
module attributes {stable_mosaic.version = 11 : i64} {
  func.func @encoder_block_kernel(%arg0: i32, %arg1: i32, %arg2: memref<1x8x32xf32, #tpu.memory_space<vmem>>, %arg3: memref<1x8x8xbf16, #tpu.memory_space<vmem>>, %arg4: memref<32x32xbf16, #tpu.memory_space<vmem>>, %arg5: memref<1x32xf32, #tpu.memory_space<vmem>>, %arg6: memref<32x32xbf16, #tpu.memory_space<vmem>>, %arg7: memref<1x32xf32, #tpu.memory_space<vmem>>, %arg8: memref<32x32xbf16, #tpu.memory_space<vmem>>, %arg9: memref<1x32xf32, #tpu.memory_space<vmem>>, %arg10: memref<32x32xbf16, #tpu.memory_space<vmem>>, %arg11: memref<1x32xf32, #tpu.memory_space<vmem>>, %arg12: memref<1x32xf32, #tpu.memory_space<vmem>>, %arg13: memref<1x32xf32, #tpu.memory_space<vmem>>, %arg14: memref<32x64xbf16, #tpu.memory_space<vmem>>, %arg15: memref<1x64xf32, #tpu.memory_space<vmem>>, %arg16: memref<64x32xbf16, #tpu.memory_space<vmem>>, %arg17: memref<1x32xf32, #tpu.memory_space<vmem>>, %arg18: memref<1x32xf32, #tpu.memory_space<vmem>>, %arg19: memref<1x32xf32, #tpu.memory_space<vmem>>, %arg20: memref<1x8x32xf32, #tpu.memory_space<vmem>>, %arg21: memref<8x4x8xbf16, #tpu.memory_space<vmem>>, %arg22: memref<8x4x8xbf16, #tpu.memory_space<vmem>>) attributes {dimension_semantics = [#tpu.dimension_semantics<parallel>, #tpu.dimension_semantics<arbitrary>], iteration_bounds = array<i64: 2, 1>, scalar_prefetch = 0 : i64, scratch_operands = 2 : i64, tpu.core_type = #tpu.core_type<tc>, window_params = [{transform_indices = @transform_0, window_bounds = array<i64: 1, 8, 32>}, {transform_indices = @transform_1, window_bounds = array<i64: 1, 8, 8>}, {pipeline_mode = #tpu.pipeline_mode<synchronous>, transform_indices = @transform_2, window_bounds = array<i64: 32, 32>}, {pipeline_mode = #tpu.pipeline_mode<synchronous>, transform_indices = @transform_3, window_bounds = array<i64: 1, 32>}, {pipeline_mode = #tpu.pipeline_mode<synchronous>, transform_indices = @transform_4, window_bounds = array<i64: 32, 32>}, {pipeline_mode = #tpu.pipeline_mode<synchronous>, transform_indices = @transform_5, window_bounds = array<i64: 1, 32>}, {pipeline_mode = #tpu.pipeline_mode<synchronous>, transform_indices = @transform_6, window_bounds = array<i64: 32, 32>}, {pipeline_mode = #tpu.pipeline_mode<synchronous>, transform_indices = @transform_7, window_bounds = array<i64: 1, 32>}, {pipeline_mode = #tpu.pipeline_mode<synchronous>, transform_indices = @transform_8, window_bounds = array<i64: 32, 32>}, {pipeline_mode = #tpu.pipeline_mode<synchronous>, transform_indices = @transform_9, window_bounds = array<i64: 1, 32>}, {pipeline_mode = #tpu.pipeline_mode<synchronous>, transform_indices = @transform_10, window_bounds = array<i64: 1, 32>}, {pipeline_mode = #tpu.pipeline_mode<synchronous>, transform_indices = @transform_11, window_bounds = array<i64: 1, 32>}, {pipeline_mode = #tpu.pipeline_mode<synchronous>, transform_indices = @transform_12, window_bounds = array<i64: 32, 64>}, {pipeline_mode = #tpu.pipeline_mode<synchronous>, transform_indices = @transform_13, window_bounds = array<i64: 1, 64>}, {pipeline_mode = #tpu.pipeline_mode<synchronous>, transform_indices = @transform_14, window_bounds = array<i64: 64, 32>}, {pipeline_mode = #tpu.pipeline_mode<synchronous>, transform_indices = @transform_15, window_bounds = array<i64: 1, 32>}, {pipeline_mode = #tpu.pipeline_mode<synchronous>, transform_indices = @transform_16, window_bounds = array<i64: 1, 32>}, {pipeline_mode = #tpu.pipeline_mode<synchronous>, transform_indices = @transform_17, window_bounds = array<i64: 1, 32>}, {transform_indices = @transform_18, window_bounds = array<i64: 1, 8, 32>}]} {
    %c0 = arith.constant 0 : index
    %c0_0 = arith.constant 0 : index
    %0 = vector.load %arg12[%c0, %c0_0] : memref<1x32xf32, #tpu.memory_space<vmem>>, vector<1x32xf32>
    %c0_1 = arith.constant 0 : index
    %c0_2 = arith.constant 0 : index
    %1 = vector.load %arg13[%c0_1, %c0_2] : memref<1x32xf32, #tpu.memory_space<vmem>>, vector<1x32xf32>
    %c0_i32 = arith.constant 0 : i32
    %2 = arith.cmpi eq, %arg1, %c0_i32 : i32
    %3 = arith.extui %2 : i1 to i32
    %c0_i32_3 = arith.constant 0 : i32
    %4 = arith.cmpi ne, %3, %c0_i32_3 : i32
    scf.if %4 {
      %c0_61 = arith.constant 0 : index
      %c0_62 = arith.constant 0 : index
      %c0_63 = arith.constant 0 : index
      %127 = vector.load %arg2[%c0_61, %c0_62, %c0_63] : memref<1x8x32xf32, #tpu.memory_space<vmem>>, vector<1x8x32xf32>
      %128 = vector.shape_cast %127 : vector<1x8x32xf32> to vector<8x32xf32>
      %cst_64 = arith.constant dense<0.000000e+00> : vector<8xf32>
      %129 = vector.multi_reduction <add>, %128, %cst_64 [1] : vector<8x32xf32> to vector<8xf32>
      %130 = vector.shape_cast %129 : vector<8xf32> to vector<8x1xf32>
      %cst_65 = arith.constant 3.200000e+01 : f32
      %131 = vector.broadcast %cst_65 : f32 to vector<8x1xf32>
      %132 = arith.divf %130, %131 : vector<8x1xf32>
      %133 = vector.broadcast %132 : vector<8x1xf32> to vector<8x32xf32>
      %134 = arith.subf %128, %133 : vector<8x32xf32>
      %135 = arith.mulf %134, %134 : vector<8x32xf32>
      %cst_66 = arith.constant dense<0.000000e+00> : vector<8xf32>
      %136 = vector.multi_reduction <add>, %135, %cst_66 [1] : vector<8x32xf32> to vector<8xf32>
      %137 = vector.shape_cast %136 : vector<8xf32> to vector<8x1xf32>
      %cst_67 = arith.constant 3.200000e+01 : f32
      %138 = vector.broadcast %cst_67 : f32 to vector<8x1xf32>
      %139 = arith.divf %137, %138 : vector<8x1xf32>
      %140 = vector.broadcast %132 : vector<8x1xf32> to vector<8x32xf32>
      %141 = arith.subf %128, %140 : vector<8x32xf32>
      %cst_68 = arith.constant 9.99999997E-7 : f32
      %142 = vector.broadcast %cst_68 : f32 to vector<8x1xf32>
      %143 = arith.addf %139, %142 : vector<8x1xf32>
      %144 = math.rsqrt %143 : vector<8x1xf32>
      %145 = vector.broadcast %144 : vector<8x1xf32> to vector<8x32xf32>
      %146 = arith.mulf %141, %145 : vector<8x32xf32>
      %147 = vector.broadcast %0 : vector<1x32xf32> to vector<8x32xf32>
      %148 = arith.mulf %146, %147 : vector<8x32xf32>
      %149 = vector.broadcast %1 : vector<1x32xf32> to vector<8x32xf32>
      %150 = arith.addf %148, %149 : vector<8x32xf32>
      %151 = arith.truncf %150 : vector<8x32xf32> to vector<8x32xbf16>
      %c0_69 = arith.constant 0 : index
      %c0_70 = arith.constant 0 : index
      %152 = vector.load %arg6[%c0_69, %c0_70] : memref<32x32xbf16, #tpu.memory_space<vmem>>, vector<32x32xbf16>
      %cst_71 = arith.constant dense<0.000000e+00> : vector<8x32xf32>
      %153 = tpu.matmul %151, %152, %cst_71 {dimension_numbers = #tpu.dot_dimension_numbers<[1], [0], [0], [1], [0, 0, 1, 1], [], []>} : vector<8x32xbf16>, vector<32x32xbf16>, vector<8x32xf32> -> vector<8x32xf32>
      %c0_72 = arith.constant 0 : index
      %c0_73 = arith.constant 0 : index
      %154 = vector.load %arg7[%c0_72, %c0_73] : memref<1x32xf32, #tpu.memory_space<vmem>>, vector<1x32xf32>
      %155 = vector.broadcast %154 : vector<1x32xf32> to vector<8x32xf32>
      %156 = arith.addf %153, %155 : vector<8x32xf32>
      %157 = vector.shape_cast %156 : vector<8x32xf32> to vector<8x4x8xf32>
      %158 = arith.truncf %157 : vector<8x4x8xf32> to vector<8x4x8xbf16>
      %c0_74 = arith.constant 0 : index
      %c0_75 = arith.constant 0 : index
      %c0_76 = arith.constant 0 : index
      %159 = vector.load %arg21[%c0_74, %c0_75, %c0_76] : memref<8x4x8xbf16, #tpu.memory_space<vmem>>, vector<8x4x8xbf16>
      tpu.vector_store %arg21[%c0_74, %c0_75, %c0_76], %158 {strides = array<i32>} : memref<8x4x8xbf16, #tpu.memory_space<vmem>>, vector<8x4x8xbf16>,
      %c0_77 = arith.constant 0 : index
      %c0_78 = arith.constant 0 : index
      %160 = vector.load %arg8[%c0_77, %c0_78] : memref<32x32xbf16, #tpu.memory_space<vmem>>, vector<32x32xbf16>
      %cst_79 = arith.constant dense<0.000000e+00> : vector<8x32xf32>
      %161 = tpu.matmul %151, %160, %cst_79 {dimension_numbers = #tpu.dot_dimension_numbers<[1], [0], [0], [1], [0, 0, 1, 1], [], []>} : vector<8x32xbf16>, vector<32x32xbf16>, vector<8x32xf32> -> vector<8x32xf32>
      %c0_80 = arith.constant 0 : index
      %c0_81 = arith.constant 0 : index
      %162 = vector.load %arg9[%c0_80, %c0_81] : memref<1x32xf32, #tpu.memory_space<vmem>>, vector<1x32xf32>
      %163 = vector.broadcast %162 : vector<1x32xf32> to vector<8x32xf32>
      %164 = arith.addf %161, %163 : vector<8x32xf32>
      %165 = vector.shape_cast %164 : vector<8x32xf32> to vector<8x4x8xf32>
      %166 = arith.truncf %165 : vector<8x4x8xf32> to vector<8x4x8xbf16>
      %c0_82 = arith.constant 0 : index
      %c0_83 = arith.constant 0 : index
      %c0_84 = arith.constant 0 : index
      %167 = vector.load %arg22[%c0_82, %c0_83, %c0_84] : memref<8x4x8xbf16, #tpu.memory_space<vmem>>, vector<8x4x8xbf16>
      tpu.vector_store %arg22[%c0_82, %c0_83, %c0_84], %166 {strides = array<i32>} : memref<8x4x8xbf16, #tpu.memory_space<vmem>>, vector<8x4x8xbf16>,
    } else {
    }
    %c8_i32 = arith.constant 8 : i32
    %5 = arith.muli %arg1, %c8_i32 : i32
    %6 = tpu.assume_multiple %5, 8 : i32
    %c0_4 = arith.constant 0 : index
    %7 = arith.index_cast %6 : i32 to index
    %c0_5 = arith.constant 0 : index
    %8 = vector.load %arg2[%c0_4, %7, %c0_5] : memref<1x8x32xf32, #tpu.memory_space<vmem>>, vector<1x8x32xf32>
    %9 = vector.shape_cast %8 : vector<1x8x32xf32> to vector<8x32xf32>
    %cst = arith.constant dense<0.000000e+00> : vector<8xf32>
    %10 = vector.multi_reduction <add>, %9, %cst [1] : vector<8x32xf32> to vector<8xf32>
    %11 = vector.shape_cast %10 : vector<8xf32> to vector<8x1xf32>
    %cst_6 = arith.constant 3.200000e+01 : f32
    %12 = vector.broadcast %cst_6 : f32 to vector<8x1xf32>
    %13 = arith.divf %11, %12 : vector<8x1xf32>
    %14 = vector.broadcast %13 : vector<8x1xf32> to vector<8x32xf32>
    %15 = arith.subf %9, %14 : vector<8x32xf32>
    %16 = arith.mulf %15, %15 : vector<8x32xf32>
    %cst_7 = arith.constant dense<0.000000e+00> : vector<8xf32>
    %17 = vector.multi_reduction <add>, %16, %cst_7 [1] : vector<8x32xf32> to vector<8xf32>
    %18 = vector.shape_cast %17 : vector<8xf32> to vector<8x1xf32>
    %cst_8 = arith.constant 3.200000e+01 : f32
    %19 = vector.broadcast %cst_8 : f32 to vector<8x1xf32>
    %20 = arith.divf %18, %19 : vector<8x1xf32>
    %21 = vector.broadcast %13 : vector<8x1xf32> to vector<8x32xf32>
    %22 = arith.subf %9, %21 : vector<8x32xf32>
    %cst_9 = arith.constant 9.99999997E-7 : f32
    %23 = vector.broadcast %cst_9 : f32 to vector<8x1xf32>
    %24 = arith.addf %20, %23 : vector<8x1xf32>
    %25 = math.rsqrt %24 : vector<8x1xf32>
    %26 = vector.broadcast %25 : vector<8x1xf32> to vector<8x32xf32>
    %27 = arith.mulf %22, %26 : vector<8x32xf32>
    %28 = vector.broadcast %0 : vector<1x32xf32> to vector<8x32xf32>
    %29 = arith.mulf %27, %28 : vector<8x32xf32>
    %30 = vector.broadcast %1 : vector<1x32xf32> to vector<8x32xf32>
    %31 = arith.addf %29, %30 : vector<8x32xf32>
    %32 = arith.truncf %31 : vector<8x32xf32> to vector<8x32xbf16>
    %c0_10 = arith.constant 0 : index
    %c0_11 = arith.constant 0 : index
    %33 = vector.load %arg4[%c0_10, %c0_11] : memref<32x32xbf16, #tpu.memory_space<vmem>>, vector<32x32xbf16>
    %cst_12 = arith.constant dense<0.000000e+00> : vector<8x32xf32>
    %34 = tpu.matmul %32, %33, %cst_12 {dimension_numbers = #tpu.dot_dimension_numbers<[1], [0], [0], [1], [0, 0, 1, 1], [], []>} : vector<8x32xbf16>, vector<32x32xbf16>, vector<8x32xf32> -> vector<8x32xf32>
    %c0_13 = arith.constant 0 : index
    %c0_14 = arith.constant 0 : index
    %35 = vector.load %arg5[%c0_13, %c0_14] : memref<1x32xf32, #tpu.memory_space<vmem>>, vector<1x32xf32>
    %36 = vector.broadcast %35 : vector<1x32xf32> to vector<8x32xf32>
    %37 = arith.addf %34, %36 : vector<8x32xf32>
    %cst_15 = arith.constant 0.353553385 : f32
    %38 = vector.broadcast %cst_15 : f32 to vector<8x32xf32>
    %39 = arith.mulf %37, %38 : vector<8x32xf32>
    %40 = vector.shape_cast %39 : vector<8x32xf32> to vector<8x4x8xf32>
    %41 = arith.truncf %40 : vector<8x4x8xf32> to vector<8x4x8xbf16>
    %cst_16 = arith.constant 0xFF800000 : f32
    %42 = vector.broadcast %cst_16 : f32 to vector<4x8x1xf32>
    %cst_17 = arith.constant 0.000000e+00 : f32
    %43 = vector.broadcast %cst_17 : f32 to vector<4x8x1xf32>
    %cst_18 = arith.constant 0.000000e+00 : f32
    %44 = vector.broadcast %cst_18 : f32 to vector<4x8x8xf32>
    %c0_19 = arith.constant 0 : index
    %c0_20 = arith.constant 0 : index
    %c0_21 = arith.constant 0 : index
    %45 = vector.load %arg21[%c0_19, %c0_20, %c0_21] : memref<8x4x8xbf16, #tpu.memory_space<vmem>>, vector<8x4x8xbf16>
    %c0_22 = arith.constant 0 : index
    %c0_23 = arith.constant 0 : index
    %c0_24 = arith.constant 0 : index
    %46 = vector.load %arg22[%c0_22, %c0_23, %c0_24] : memref<8x4x8xbf16, #tpu.memory_space<vmem>>, vector<8x4x8xbf16>
    %c0_25 = arith.constant 0 : index
    %c0_26 = arith.constant 0 : index
    %c0_27 = arith.constant 0 : index
    %47 = vector.load %arg3[%c0_25, %c0_26, %c0_27] : memref<1x8x8xbf16, #tpu.memory_space<vmem>>, vector<1x8x8xbf16>
    %48 = vector.shape_cast %47 : vector<1x8x8xbf16> to vector<8x8xbf16>
    %49 = arith.extf %48 : vector<8x8xbf16> to vector<8x8xf32>
    "tpu.trace_start"() <{level = 10 : i32, message = "qhd,khd->hqk"}> : () -> ()
    %cst_28 = arith.constant dense<0.000000e+00> : vector<4x8x8xf32>
    %50 = tpu.matmul %41, %45, %cst_28 {dimension_numbers = #tpu.dot_dimension_numbers<[2], [2], [0], [0], [0, 1, 0, 0, 1, 0], [1], [1]>} : vector<8x4x8xbf16>, vector<8x4x8xbf16>, vector<4x8x8xf32> -> vector<4x8x8xf32>
    "tpu.trace_stop"() : () -> ()
    %51 = vector.shape_cast %49 : vector<8x8xf32> to vector<1x8x8xf32>
    %52 = vector.broadcast %51 : vector<1x8x8xf32> to vector<4x8x8xf32>
    %53 = arith.addf %50, %52 : vector<4x8x8xf32>
    %cst_29 = arith.constant dense<0xFF800000> : vector<4x8xf32>
    %54 = vector.multi_reduction <maximumf>, %53, %cst_29 [2] : vector<4x8x8xf32> to vector<4x8xf32>
    %55 = vector.shape_cast %54 : vector<4x8xf32> to vector<4x8x1xf32>
    %56 = arith.maximumf %42, %55 : vector<4x8x1xf32>
    %57 = arith.subf %42, %56 : vector<4x8x1xf32>
    %58 = math.exp %57 : vector<4x8x1xf32>
    %59 = vector.broadcast %56 : vector<4x8x1xf32> to vector<4x8x8xf32>
    %60 = arith.subf %53, %59 : vector<4x8x8xf32>
    %61 = math.exp %60 : vector<4x8x8xf32>
    %62 = arith.mulf %58, %43 : vector<4x8x1xf32>
    %cst_30 = arith.constant dense<0.000000e+00> : vector<4x8xf32>
    %63 = vector.multi_reduction <add>, %61, %cst_30 [2] : vector<4x8x8xf32> to vector<4x8xf32>
    %64 = vector.shape_cast %63 : vector<4x8xf32> to vector<4x8x1xf32>
    %65 = arith.addf %62, %64 : vector<4x8x1xf32>
    %66 = vector.broadcast %58 : vector<4x8x1xf32> to vector<4x8x8xf32>
    %67 = arith.mulf %66, %44 : vector<4x8x8xf32>
    %68 = arith.truncf %61 : vector<4x8x8xf32> to vector<4x8x8xbf16>
    "tpu.trace_start"() <{level = 10 : i32, message = "hqk,khd->hqd"}> : () -> ()
    %cst_31 = arith.constant dense<0.000000e+00> : vector<4x8x8xf32>
    %69 = tpu.matmul %68, %46, %cst_31 {dimension_numbers = #tpu.dot_dimension_numbers<[2], [0], [1], [2], [0, 0, 0, 1, 1, 2], [0], [1]>} : vector<4x8x8xbf16>, vector<8x4x8xbf16>, vector<4x8x8xf32> -> vector<4x8x8xf32>
    "tpu.trace_stop"() : () -> ()
    %70 = arith.addf %67, %69 : vector<4x8x8xf32>
    %71 = tpu.reciprocal %65 {approx = true} : vector<4x8x1xf32> -> vector<4x8x1xf32>
    %72 = vector.broadcast %71 : vector<4x8x1xf32> to vector<4x8x8xf32>
    %73 = arith.mulf %70, %72 : vector<4x8x8xf32>
    %74 = tpu.transpose %73, [1, 0, 2] : vector<4x8x8xf32> -> vector<8x4x8xf32>
    %75 = vector.shape_cast %74 : vector<8x4x8xf32> to vector<8x32xf32>
    %76 = arith.truncf %75 : vector<8x32xf32> to vector<8x32xbf16>
    %c0_32 = arith.constant 0 : index
    %c0_33 = arith.constant 0 : index
    %77 = vector.load %arg10[%c0_32, %c0_33] : memref<32x32xbf16, #tpu.memory_space<vmem>>, vector<32x32xbf16>
    %cst_34 = arith.constant dense<0.000000e+00> : vector<8x32xf32>
    %78 = tpu.matmul %76, %77, %cst_34 {dimension_numbers = #tpu.dot_dimension_numbers<[1], [0], [0], [1], [0, 0, 1, 1], [], []>} : vector<8x32xbf16>, vector<32x32xbf16>, vector<8x32xf32> -> vector<8x32xf32>
    %c0_35 = arith.constant 0 : index
    %c0_36 = arith.constant 0 : index
    %79 = vector.load %arg11[%c0_35, %c0_36] : memref<1x32xf32, #tpu.memory_space<vmem>>, vector<1x32xf32>
    %80 = vector.broadcast %79 : vector<1x32xf32> to vector<8x32xf32>
    %81 = arith.addf %78, %80 : vector<8x32xf32>
    %82 = arith.addf %9, %81 : vector<8x32xf32>
    %c0_37 = arith.constant 0 : index
    %c0_38 = arith.constant 0 : index
    %83 = vector.load %arg18[%c0_37, %c0_38] : memref<1x32xf32, #tpu.memory_space<vmem>>, vector<1x32xf32>
    %c0_39 = arith.constant 0 : index
    %c0_40 = arith.constant 0 : index
    %84 = vector.load %arg19[%c0_39, %c0_40] : memref<1x32xf32, #tpu.memory_space<vmem>>, vector<1x32xf32>
    %cst_41 = arith.constant dense<0.000000e+00> : vector<8xf32>
    %85 = vector.multi_reduction <add>, %82, %cst_41 [1] : vector<8x32xf32> to vector<8xf32>
    %86 = vector.shape_cast %85 : vector<8xf32> to vector<8x1xf32>
    %cst_42 = arith.constant 3.200000e+01 : f32
    %87 = vector.broadcast %cst_42 : f32 to vector<8x1xf32>
    %88 = arith.divf %86, %87 : vector<8x1xf32>
    %89 = vector.broadcast %88 : vector<8x1xf32> to vector<8x32xf32>
    %90 = arith.subf %82, %89 : vector<8x32xf32>
    %91 = arith.mulf %90, %90 : vector<8x32xf32>
    %cst_43 = arith.constant dense<0.000000e+00> : vector<8xf32>
    %92 = vector.multi_reduction <add>, %91, %cst_43 [1] : vector<8x32xf32> to vector<8xf32>
    %93 = vector.shape_cast %92 : vector<8xf32> to vector<8x1xf32>
    %cst_44 = arith.constant 3.200000e+01 : f32
    %94 = vector.broadcast %cst_44 : f32 to vector<8x1xf32>
    %95 = arith.divf %93, %94 : vector<8x1xf32>
    %96 = vector.broadcast %88 : vector<8x1xf32> to vector<8x32xf32>
    %97 = arith.subf %82, %96 : vector<8x32xf32>
    %cst_45 = arith.constant 9.99999997E-7 : f32
    %98 = vector.broadcast %cst_45 : f32 to vector<8x1xf32>
    %99 = arith.addf %95, %98 : vector<8x1xf32>
    %100 = math.rsqrt %99 : vector<8x1xf32>
    %101 = vector.broadcast %100 : vector<8x1xf32> to vector<8x32xf32>
    %102 = arith.mulf %97, %101 : vector<8x32xf32>
    %103 = vector.broadcast %83 : vector<1x32xf32> to vector<8x32xf32>
    %104 = arith.mulf %102, %103 : vector<8x32xf32>
    %105 = vector.broadcast %84 : vector<1x32xf32> to vector<8x32xf32>
    %106 = arith.addf %104, %105 : vector<8x32xf32>
    %107 = arith.truncf %106 : vector<8x32xf32> to vector<8x32xbf16>
    %cst_46 = arith.constant 0.000000e+00 : f32
    %108 = vector.broadcast %cst_46 : f32 to vector<8x32xf32>
    %c0_47 = arith.constant 0 : index
    %c0_48 = arith.constant 0 : index
    %109 = vector.load %arg14[%c0_47, %c0_48] : memref<32x64xbf16, #tpu.memory_space<vmem>>, vector<32x64xbf16>
    %cst_49 = arith.constant dense<0.000000e+00> : vector<8x64xf32>
    %110 = tpu.matmul %107, %109, %cst_49 {dimension_numbers = #tpu.dot_dimension_numbers<[1], [0], [0], [1], [0, 0, 1, 1], [], []>} : vector<8x32xbf16>, vector<32x64xbf16>, vector<8x64xf32> -> vector<8x64xf32>
    %c0_50 = arith.constant 0 : index
    %c0_51 = arith.constant 0 : index
    %111 = vector.load %arg15[%c0_50, %c0_51] : memref<1x64xf32, #tpu.memory_space<vmem>>, vector<1x64xf32>
    %112 = vector.broadcast %111 : vector<1x64xf32> to vector<8x64xf32>
    %113 = arith.addf %110, %112 : vector<8x64xf32>
    %cst_52 = arith.constant 0.000000e+00 : f32
    %114 = vector.broadcast %cst_52 : f32 to vector<8x64xf32>
    %115 = arith.maximumf %113, %114 : vector<8x64xf32>
    %116 = arith.truncf %115 : vector<8x64xf32> to vector<8x64xbf16>
    %c0_53 = arith.constant 0 : index
    %c0_54 = arith.constant 0 : index
    %117 = vector.load %arg16[%c0_53, %c0_54] : memref<64x32xbf16, #tpu.memory_space<vmem>>, vector<64x32xbf16>
    %cst_55 = arith.constant dense<0.000000e+00> : vector<8x32xf32>
    %118 = tpu.matmul %116, %117, %cst_55 {dimension_numbers = #tpu.dot_dimension_numbers<[1], [0], [0], [1], [0, 0, 1, 1], [], []>} : vector<8x64xbf16>, vector<64x32xbf16>, vector<8x32xf32> -> vector<8x32xf32>
    %119 = arith.addf %108, %118 : vector<8x32xf32>
    %c0_56 = arith.constant 0 : index
    %c0_57 = arith.constant 0 : index
    %120 = vector.load %arg17[%c0_56, %c0_57] : memref<1x32xf32, #tpu.memory_space<vmem>>, vector<1x32xf32>
    %121 = vector.broadcast %120 : vector<1x32xf32> to vector<8x32xf32>
    %122 = arith.addf %119, %121 : vector<8x32xf32>
    %123 = arith.addf %82, %122 : vector<8x32xf32>
    %c0_58 = arith.constant 0 : index
    %c0_59 = arith.constant 0 : index
    %c0_60 = arith.constant 0 : index
    %124 = vector.load %arg20[%c0_58, %c0_59, %c0_60] : memref<1x8x32xf32, #tpu.memory_space<vmem>>, vector<1x8x32xf32>
    %125 = vector.shape_cast %124 : vector<1x8x32xf32> to vector<8x32xf32>
    %126 = vector.shape_cast %123 : vector<8x32xf32> to vector<1x8x32xf32>
    tpu.vector_store %arg20[%c0_58, %c0_59, %c0_60], %126 {strides = array<i32>} : memref<1x8x32xf32, #tpu.memory_space<vmem>>, vector<1x8x32xf32>,
    return
  }
  func.func @transform_0(%arg0: i32, %arg1: i32) -> (i32, i32, i32) {
    %c0_i32 = arith.constant 0 : i32
    %c0_i32_0 = arith.constant 0 : i32
    %c0_i32_1 = arith.constant 0 : i32
    return %arg0, %c0_i32, %c0_i32_0 : i32, i32, i32
  }
  func.func @transform_1(%arg0: i32, %arg1: i32) -> (i32, i32, i32) {
    %c0_i32 = arith.constant 0 : i32
    %c0_i32_0 = arith.constant 0 : i32
    return %arg0, %arg1, %c0_i32 : i32, i32, i32
  }
  func.func @transform_2(%arg0: i32, %arg1: i32) -> (i32, i32) {
    %c0_i32 = arith.constant 0 : i32
    %c0_i32_0 = arith.constant 0 : i32
    %c0_i32_1 = arith.constant 0 : i32
    return %c0_i32, %c0_i32_0 : i32, i32
  }
  func.func @transform_3(%arg0: i32, %arg1: i32) -> (i32, i32) {
    %c0_i32 = arith.constant 0 : i32
    %c0_i32_0 = arith.constant 0 : i32
    %c0_i32_1 = arith.constant 0 : i32
    return %c0_i32, %c0_i32_0 : i32, i32
  }
  func.func @transform_4(%arg0: i32, %arg1: i32) -> (i32, i32) {
    %c0_i32 = arith.constant 0 : i32
    %c0_i32_0 = arith.constant 0 : i32
    %c0_i32_1 = arith.constant 0 : i32
    return %c0_i32, %c0_i32_0 : i32, i32
  }
  func.func @transform_5(%arg0: i32, %arg1: i32) -> (i32, i32) {
    %c0_i32 = arith.constant 0 : i32
    %c0_i32_0 = arith.constant 0 : i32
    %c0_i32_1 = arith.constant 0 : i32
    return %c0_i32, %c0_i32_0 : i32, i32
  }
  func.func @transform_6(%arg0: i32, %arg1: i32) -> (i32, i32) {
    %c0_i32 = arith.constant 0 : i32
    %c0_i32_0 = arith.constant 0 : i32
    %c0_i32_1 = arith.constant 0 : i32
    return %c0_i32, %c0_i32_0 : i32, i32
  }
  func.func @transform_7(%arg0: i32, %arg1: i32) -> (i32, i32) {
    %c0_i32 = arith.constant 0 : i32
    %c0_i32_0 = arith.constant 0 : i32
    %c0_i32_1 = arith.constant 0 : i32
    return %c0_i32, %c0_i32_0 : i32, i32
  }
  func.func @transform_8(%arg0: i32, %arg1: i32) -> (i32, i32) {
    %c0_i32 = arith.constant 0 : i32
    %c0_i32_0 = arith.constant 0 : i32
    %c0_i32_1 = arith.constant 0 : i32
    return %c0_i32, %c0_i32_0 : i32, i32
  }
  func.func @transform_9(%arg0: i32, %arg1: i32) -> (i32, i32) {
    %c0_i32 = arith.constant 0 : i32
    %c0_i32_0 = arith.constant 0 : i32
    %c0_i32_1 = arith.constant 0 : i32
    return %c0_i32, %c0_i32_0 : i32, i32
  }
  func.func @transform_10(%arg0: i32, %arg1: i32) -> (i32, i32) {
    %c0_i32 = arith.constant 0 : i32
    %c0_i32_0 = arith.constant 0 : i32
    %c0_i32_1 = arith.constant 0 : i32
    return %c0_i32, %c0_i32_0 : i32, i32
  }
  func.func @transform_11(%arg0: i32, %arg1: i32) -> (i32, i32) {
    %c0_i32 = arith.constant 0 : i32
    %c0_i32_0 = arith.constant 0 : i32
    %c0_i32_1 = arith.constant 0 : i32
    return %c0_i32, %c0_i32_0 : i32, i32
  }
  func.func @transform_12(%arg0: i32, %arg1: i32) -> (i32, i32) {
    %c0_i32 = arith.constant 0 : i32
    %c0_i32_0 = arith.constant 0 : i32
    %c0_i32_1 = arith.constant 0 : i32
    return %c0_i32, %c0_i32_0 : i32, i32
  }
  func.func @transform_13(%arg0: i32, %arg1: i32) -> (i32, i32) {
    %c0_i32 = arith.constant 0 : i32
    %c0_i32_0 = arith.constant 0 : i32
    %c0_i32_1 = arith.constant 0 : i32
    return %c0_i32, %c0_i32_0 : i32, i32
  }
  func.func @transform_14(%arg0: i32, %arg1: i32) -> (i32, i32) {
    %c0_i32 = arith.constant 0 : i32
    %c0_i32_0 = arith.constant 0 : i32
    %c0_i32_1 = arith.constant 0 : i32
    return %c0_i32, %c0_i32_0 : i32, i32
  }
  func.func @transform_15(%arg0: i32, %arg1: i32) -> (i32, i32) {
    %c0_i32 = arith.constant 0 : i32
    %c0_i32_0 = arith.constant 0 : i32
    %c0_i32_1 = arith.constant 0 : i32
    return %c0_i32, %c0_i32_0 : i32, i32
  }
  func.func @transform_16(%arg0: i32, %arg1: i32) -> (i32, i32) {
    %c0_i32 = arith.constant 0 : i32
    %c0_i32_0 = arith.constant 0 : i32
    %c0_i32_1 = arith.constant 0 : i32
    return %c0_i32, %c0_i32_0 : i32, i32
  }
  func.func @transform_17(%arg0: i32, %arg1: i32) -> (i32, i32) {
    %c0_i32 = arith.constant 0 : i32
    %c0_i32_0 = arith.constant 0 : i32
    %c0_i32_1 = arith.constant 0 : i32
    return %c0_i32, %c0_i32_0 : i32, i32
  }
  func.func @transform_18(%arg0: i32, %arg1: i32) -> (i32, i32, i32) {
    %c0_i32 = arith.constant 0 : i32
    %c0_i32_0 = arith.constant 0 : i32
    return %arg0, %arg1, %c0_i32 : i32, i32, i32
  }
}

</mosaic_0001>

<llo_original>
// kernel: tpu_custom_call.1
$region0: #{tpu_custom_call.1}
  #allocation0 [shape = 'u32[]', space=smem, size = 0x4, offset = 0x4, fixed_abs, tag = 'smem constant byte address 0x4 - core index']
  #allocation1 [shape = 'u32[144,128]{1,0:T(1,128)}', space=vmem, size = 0x12000, scoped, tag = 'internal scratch']
  #allocation2 [shape = 'bf16[8,4,8]{2,1,0:T(4,128)(2,1)}', space=vmem, size = 0x2000, scoped, tag = 'scratch operand']
  #allocation3 [shape = 'bf16[8,4,8]{2,1,0:T(4,128)(2,1)}', space=vmem, size = 0x2000, scoped, tag = 'scratch operand']
  %s0 = inlined_call_operand.vmem [shape: f32[2,8,32], index: 0, kind: input, shape index: {}]
  %s1 = inlined_call_operand.hbm [shape: bf16[2,8,8], index: 1, kind: input, shape index: {}]
  %s2 = inlined_call_operand.vmem [shape: bf16[32,32], index: 2, kind: input, shape index: {}]
  %s3 = inlined_call_operand.vmem [shape: f32[1,32], index: 3, kind: input, shape index: {}]
  %s4 = inlined_call_operand.vmem [shape: bf16[32,32], index: 4, kind: input, shape index: {}]
  %s5 = inlined_call_operand.vmem [shape: f32[1,32], index: 5, kind: input, shape index: {}]
  %s6 = inlined_call_operand.hbm [shape: bf16[32,32], index: 6, kind: input, shape index: {}]
  %s7 = inlined_call_operand.hbm [shape: f32[1,32], index: 7, kind: input, shape index: {}]
  %s8 = inlined_call_operand.hbm [shape: bf16[32,32], index: 8, kind: input, shape index: {}]
  %s9 = inlined_call_operand.hbm [shape: f32[1,32], index: 9, kind: input, shape index: {}]
  %s10 = inlined_call_operand.vmem [shape: f32[1,32], index: 10, kind: input, shape index: {}]
  %s11 = inlined_call_operand.vmem [shape: f32[1,32], index: 11, kind: input, shape index: {}]
  %s12 = inlined_call_operand.vmem [shape: bf16[32,64], index: 12, kind: input, shape index: {}]
  %s13 = inlined_call_operand.vmem [shape: f32[1,64], index: 13, kind: input, shape index: {}]
  %s14 = inlined_call_operand.vmem [shape: bf16[64,32], index: 14, kind: input, shape index: {}]
  %s15 = inlined_call_operand.vmem [shape: f32[1,32], index: 15, kind: input, shape index: {}]
  %s16 = inlined_call_operand.vmem [shape: f32[1,32], index: 16, kind: input, shape index: {}]
  %s17 = inlined_call_operand.vmem [shape: f32[1,32], index: 17, kind: input, shape index: {}]
  %s18 = inlined_call_operand.hbm [shape: f32[2,8,32], index: 18, kind: output, shape index: {}]
  %s19 = sld [smem:[#allocation0]]
  $region129: #{tpu_custom_call.1} parent=0
    _
  %s21 = ssub.s32 1, %s19
  %s22 = scalar_select 0, %s21, %s19
  $region1: #{tpu_custom_call.1} parent=0
    #allocation4 [shape = 'u8[4096]{0}', space=vmem, size = 0x1000, scoped, tag = 'input window, operand 1']
    #allocation5 [shape = 's32[2]{0}', space=sflag, size = 0x8, scoped, tag = 'scoped memory for tpu_custom_call.1']
    #allocation6 [shape = 's32[2]{0}', space=sflag, size = 0x8, scoped, tag = 'scoped memory for tpu_custom_call.1']
    #allocation7 [shape = 'u8[8192]{0}', space=vmem, size = 0x2000, scoped, tag = 'input window, operand 6, single buffered']
    #allocation8 [shape = 's32[1]{0}', space=sflag, size = 0x4, scoped, tag = 'scoped memory for tpu_custom_call.1']
    #allocation9 [shape = 'u8[512]{0}', space=vmem, size = 0x400, scoped, tag = 'input window, operand 7, single buffered']
    #allocation10 [shape = 'u8[8192]{0}', space=vmem, size = 0x2000, scoped, tag = 'input window, operand 8, single buffered']
    #allocation11 [shape = 's32[1]{0}', space=sflag, size = 0x4, scoped, tag = 'scoped memory for tpu_custom_call.1']
    #allocation12 [shape = 'u8[512]{0}', space=vmem, size = 0x400, scoped, tag = 'input window, operand 9, single buffered']
    #allocation13 [shape = 'u8[8192]{0}', space=vmem, size = 0x2000, scoped, tag = 'output window, operand 0']
    %23 = vsyncpa [#allocation5], 0
    %s24 = scalar_lea.sflag [#allocation5], 1
    %25 = vsyncpa %s24, 0
    %26 = vsyncpa [#allocation8], 0
    %27 = vsyncpa [#allocation11], 0
    %28 = vsyncpa [#allocation6], 0
    %s29 = scalar_lea.sflag [#allocation6], 1
    %30 = vsyncpa %s29, 0
    loop: start=0, step=1, limit=4
    $region2: #{tpu_custom_call.1} parent=1 // loop_pre_header
      _
    $region3: #{tpu_custom_call.1} parent=1 // loop_header
      %s32 = sphi 0, %s36
      %p33 = scmp.ge.s32.totalorder %s32, 4
      %s39 = sphi 0, %s51
      %s40 = sphi 0, %s47
      %s41 = sphi 0, %s39
      %s42 = sphi 0, %s40
      %s43 = sphi 0, %s41
      %s44 = sphi 0, %s42
      %s54 = sphi 0, %s56
      %s57 = sphi 0, %s54
      %s58 = sphi 0, %s57
      %s74 = sphi 0, %s58
      %s82 = sphi 0, %s84
      %s85 = sphi 0, %s82
      %s86 = sphi 0, %s85
      %s102 = sphi 0, %s86
      %s106 = sphi 0, %s106
      %s108 = sphi 0, %s106
      %s109 = sphi 0, %s108
      %s123 = sphi 0, %s109
      %s127 = sphi 0, %s127
      %s129 = sphi 0, %s127
      %s130 = sphi 0, %s129
      %s144 = sphi 0, %s130
      %s148 = sphi 0, %s148
      %s150 = sphi 0, %s148
      %s151 = sphi 0, %s150
      %s165 = sphi 0, %s151
      %s169 = sphi 0, %s169
      %s171 = sphi 0, %s169
      %s172 = sphi 0, %s171
      %s186 = sphi 0, %s172
      %s190 = sphi 0, %s190
      %s192 = sphi 0, %s190
      %s193 = sphi 0, %s192
      %s207 = sphi 0, %s193
      %s211 = sphi 0, %s211
      %s213 = sphi 0, %s211
      %s214 = sphi 0, %s213
      %s228 = sphi 0, %s214
      %s232 = sphi 0, %s232
      %s234 = sphi 0, %s232
      %s235 = sphi 0, %s234
      %s249 = sphi 0, %s235
      %s253 = sphi 0, %s253
      %s255 = sphi 0, %s253
      %s256 = sphi 0, %s255
      %s270 = sphi 0, %s256
      %s274 = sphi 0, %s274
      %s276 = sphi 0, %s274
      %s277 = sphi 0, %s276
      %s291 = sphi 0, %s277
      %s295 = sphi 0, %s295
      %s297 = sphi 0, %s295
      %s298 = sphi 0, %s297
      %s312 = sphi 0, %s298
      %s316 = sphi 0, %s316
      %s318 = sphi 0, %s316
      %s319 = sphi 0, %s318
      %s333 = sphi 0, %s319
      %s337 = sphi 0, %s337
      %s339 = sphi 0, %s337
      %s340 = sphi 0, %s339
      %s354 = sphi 0, %s340
      %s358 = sphi 0, %s358
      %s360 = sphi 0, %s358
      %s361 = sphi 0, %s360
      %s375 = sphi 0, %s361
      %s379 = sphi 0, %s379
      %s381 = sphi 0, %s379
      %s382 = sphi 0, %s381
      %s396 = sphi 0, %s382
      %s400 = sphi 0, %s400
      %s402 = sphi 0, %s400
      %s403 = sphi 0, %s402
      %s417 = sphi 0, %s403
      %s421 = sphi 0, %s421
      %s423 = sphi 0, %s421
      %s424 = sphi 0, %s423
      %s438 = sphi 0, %s424
      %s446 = sphi 0, %s448
      %s449 = sphi 0, %s446
      %s450 = sphi 0, %s449
      %s466 = sphi 0, %s450
    $region4: #{tpu_custom_call.1} parent=1 // loop_header_branch
      %35 = sbr.rel (%p33) target = $region8
    $region5: #{tpu_custom_call.1} parent=1 // loop_body
      %s37 = ssub.s32 %s32, 1
      %s38 = ssub.s32 %s32, 2
      %s45 = sadd.s32 1, %s40
      %p46 = scmp.ge.s32.totalorder %s45, 1
      %s47 = scalar_select %p46, 0, %s45
      %s48 = sadd.s32 1, %s39
      %s49 = scalar_select %p46, %s48, %s39
      %p50 = scmp.ge.s32.totalorder %s49, 2
      %s51 = scalar_select %p50, 0, %s49
      %s52 = ssub.s32 %s39, %s51
      %p53 = scmp.eq.s32.totalorder %s52, 0
      %s55 = sadd.s32 %s54, 1
      %s56 = scalar_select %p53, %s54, %s55
      %p59 = pneg %p53
      %p60 = scmp.eq.s32.totalorder %s32, 1
      %p61 = por %p59, %p60
      %p62 = scmp.ne.s32.totalorder %s54, %s57
      %p63 = scmp.eq.s32.totalorder %s32, 0
      %p64 = por %p62, %p63
      %p65 = scmp.ne.s32.totalorder %s54, %s57
      %p66 = scmp.eq.s32.totalorder %s37, 1
      %p67 = por %p65, %p66
      %p68 = scmp.ne.s32.totalorder %s57, %s58
      %p69 = scmp.eq.s32.totalorder %s37, 0
      %p70 = por %p68, %p69
      %p71 = scmp.ne.s32.totalorder %s57, %s58
      %p72 = scmp.eq.s32.totalorder %s38, 1
      %p73 = por %p71, %p72
      %p75 = scmp.ne.s32.totalorder %s58, %s74
      %p76 = scmp.eq.s32.totalorder %s38, 0
      %p77 = por %p75, %p76
      %s78 = ssub.s32 %s39, %s51
      %s79 = ssub.s32 %s40, %s47
      %s80 = sor.u32 %s78, %s79
      %p81 = scmp.eq.s32.totalorder %s80, 0
      %s83 = sadd.s32 %s82, 1
      %s84 = scalar_select %p81, %s82, %s83
      %p87 = pneg %p81
      %p88 = scmp.eq.s32.totalorder %s32, 1
      %p89 = por %p87, %p88
      %p90 = scmp.ne.s32.totalorder %s82, %s85
      %p91 = scmp.eq.s32.totalorder %s32, 0
      %p92 = por %p90, %p91
      %p93 = scmp.ne.s32.totalorder %s82, %s85
      %p94 = scmp.eq.s32.totalorder %s37, 1
      %p95 = por %p93, %p94
      %p96 = scmp.ne.s32.totalorder %s85, %s86
      %p97 = scmp.eq.s32.totalorder %s37, 0
      %p98 = por %p96, %p97
      %p99 = scmp.ne.s32.totalorder %s85, %s86
      %p100 = scmp.eq.s32.totalorder %s38, 1
      %p101 = por %p99, %p100
      %p103 = scmp.ne.s32.totalorder %s86, %s102
      %p104 = scmp.eq.s32.totalorder %s38, 0
      %p105 = por %p103, %p104
      %s107 = sadd.s32 %s106, 1
      %p110 = scmp.eq.s32.totalorder %s32, 1
      %p111 = scmp.ne.s32.totalorder %s106, %s108
      %p112 = scmp.eq.s32.totalorder %s32, 0
      %p113 = por %p111, %p112
      %p114 = scmp.ne.s32.totalorder %s106, %s108
      %p115 = scmp.eq.s32.totalorder %s37, 1
      %p116 = por %p114, %p115
      %p117 = scmp.ne.s32.totalorder %s108, %s109
      %p118 = scmp.eq.s32.totalorder %s37, 0
      %p119 = por %p117, %p118
      %p120 = scmp.ne.s32.totalorder %s108, %s109
      %p121 = scmp.eq.s32.totalorder %s38, 1
      %p122 = por %p120, %p121
      %p124 = scmp.ne.s32.totalorder %s109, %s123
      %p125 = scmp.eq.s32.totalorder %s38, 0
      %p126 = por %p124, %p125
      %s128 = sadd.s32 %s127, 1
      %p131 = scmp.eq.s32.totalorder %s32, 1
      %p132 = scmp.ne.s32.totalorder %s127, %s129
      %p133 = scmp.eq.s32.totalorder %s32, 0
      %p134 = por %p132, %p133
      %p135 = scmp.ne.s32.totalorder %s127, %s129
      %p136 = scmp.eq.s32.totalorder %s37, 1
      %p137 = por %p135, %p136
      %p138 = scmp.ne.s32.totalorder %s129, %s130
      %p139 = scmp.eq.s32.totalorder %s37, 0
      %p140 = por %p138, %p139
      %p141 = scmp.ne.s32.totalorder %s129, %s130
      %p142 = scmp.eq.s32.totalorder %s38, 1
      %p143 = por %p141, %p142
      %p145 = scmp.ne.s32.totalorder %s130, %s144
      %p146 = scmp.eq.s32.totalorder %s38, 0
      %p147 = por %p145, %p146
      %s149 = sadd.s32 %s148, 1
      %p152 = scmp.eq.s32.totalorder %s32, 1
      %p153 = scmp.ne.s32.totalorder %s148, %s150
      %p154 = scmp.eq.s32.totalorder %s32, 0
      %p155 = por %p153, %p154
      %p156 = scmp.ne.s32.totalorder %s148, %s150
      %p157 = scmp.eq.s32.totalorder %s37, 1
      %p158 = por %p156, %p157
      %p159 = scmp.ne.s32.totalorder %s150, %s151
      %p160 = scmp.eq.s32.totalorder %s37, 0
      %p161 = por %p159, %p160
      %p162 = scmp.ne.s32.totalorder %s150, %s151
      %p163 = scmp.eq.s32.totalorder %s38, 1
      %p164 = por %p162, %p163
      %p166 = scmp.ne.s32.totalorder %s151, %s165
      %p167 = scmp.eq.s32.totalorder %s38, 0
      %p168 = por %p166, %p167
      %s170 = sadd.s32 %s169, 1
      %p173 = scmp.eq.s32.totalorder %s32, 1
      %p174 = scmp.ne.s32.totalorder %s169, %s171
      %p175 = scmp.eq.s32.totalorder %s32, 0
      %p176 = por %p174, %p175
      %p177 = scmp.ne.s32.totalorder %s169, %s171
      %p178 = scmp.eq.s32.totalorder %s37, 1
      %p179 = por %p177, %p178
      %p180 = scmp.ne.s32.totalorder %s171, %s172
      %p181 = scmp.eq.s32.totalorder %s37, 0
      %p182 = por %p180, %p181
      %p183 = scmp.ne.s32.totalorder %s171, %s172
      %p184 = scmp.eq.s32.totalorder %s38, 1
      %p185 = por %p183, %p184
      %p187 = scmp.ne.s32.totalorder %s172, %s186
      %p188 = scmp.eq.s32.totalorder %s38, 0
      %p189 = por %p187, %p188
      %s191 = sadd.s32 %s190, 1
      %p194 = scmp.eq.s32.totalorder %s32, 1
      %p195 = scmp.ne.s32.totalorder %s190, %s192
      %p196 = scmp.eq.s32.totalorder %s32, 0
      %p197 = por %p195, %p196
      %p198 = scmp.ne.s32.totalorder %s190, %s192
      %p199 = scmp.eq.s32.totalorder %s37, 1
      %p200 = por %p198, %p199
      %p201 = scmp.ne.s32.totalorder %s192, %s193
      %p202 = scmp.eq.s32.totalorder %s37, 0
      %p203 = por %p201, %p202
      %p204 = scmp.ne.s32.totalorder %s192, %s193
      %p205 = scmp.eq.s32.totalorder %s38, 1
      %p206 = por %p204, %p205
      %p208 = scmp.ne.s32.totalorder %s193, %s207
      %p209 = scmp.eq.s32.totalorder %s38, 0
      %p210 = por %p208, %p209
      %s212 = sadd.s32 %s211, 1
      %p215 = scmp.eq.s32.totalorder %s32, 1
      %p216 = scmp.ne.s32.totalorder %s211, %s213
      %p217 = scmp.eq.s32.totalorder %s32, 0
      %p218 = por %p216, %p217
      %p219 = scmp.ne.s32.totalorder %s211, %s213
      %p220 = scmp.eq.s32.totalorder %s37, 1
      %p221 = por %p219, %p220
      %p222 = scmp.ne.s32.totalorder %s213, %s214
      %p223 = scmp.eq.s32.totalorder %s37, 0
      %p224 = por %p222, %p223
      %p225 = scmp.ne.s32.totalorder %s213, %s214
      %p226 = scmp.eq.s32.totalorder %s38, 1
      %p227 = por %p225, %p226
      %p229 = scmp.ne.s32.totalorder %s214, %s228
      %p230 = scmp.eq.s32.totalorder %s38, 0
      %p231 = por %p229, %p230
      %s233 = sadd.s32 %s232, 1
      %p236 = scmp.eq.s32.totalorder %s32, 1
      %p237 = scmp.ne.s32.totalorder %s232, %s234
      %p238 = scmp.eq.s32.totalorder %s32, 0
      %p239 = por %p237, %p238
      %p240 = scmp.ne.s32.totalorder %s232, %s234
      %p241 = scmp.eq.s32.totalorder %s37, 1
      %p242 = por %p240, %p241
      %p243 = scmp.ne.s32.totalorder %s234, %s235
      %p244 = scmp.eq.s32.totalorder %s37, 0
      %p245 = por %p243, %p244
      %p246 = scmp.ne.s32.totalorder %s234, %s235
      %p247 = scmp.eq.s32.totalorder %s38, 1
      %p248 = por %p246, %p247
      %p250 = scmp.ne.s32.totalorder %s235, %s249
      %p251 = scmp.eq.s32.totalorder %s38, 0
      %p252 = por %p250, %p251
      %s254 = sadd.s32 %s253, 1
      %p257 = scmp.eq.s32.totalorder %s32, 1
      %p258 = scmp.ne.s32.totalorder %s253, %s255
      %p259 = scmp.eq.s32.totalorder %s32, 0
      %p260 = por %p258, %p259
      %p261 = scmp.ne.s32.totalorder %s253, %s255
      %p262 = scmp.eq.s32.totalorder %s37, 1
      %p263 = por %p261, %p262
      %p264 = scmp.ne.s32.totalorder %s255, %s256
      %p265 = scmp.eq.s32.totalorder %s37, 0
      %p266 = por %p264, %p265
      %p267 = scmp.ne.s32.totalorder %s255, %s256
      %p268 = scmp.eq.s32.totalorder %s38, 1
      %p269 = por %p267, %p268
      %p271 = scmp.ne.s32.totalorder %s256, %s270
      %p272 = scmp.eq.s32.totalorder %s38, 0
      %p273 = por %p271, %p272
      %s275 = sadd.s32 %s274, 1
      %p278 = scmp.eq.s32.totalorder %s32, 1
      %p279 = scmp.ne.s32.totalorder %s274, %s276
      %p280 = scmp.eq.s32.totalorder %s32, 0
      %p281 = por %p279, %p280
      %p282 = scmp.ne.s32.totalorder %s274, %s276
      %p283 = scmp.eq.s32.totalorder %s37, 1
      %p284 = por %p282, %p283
      %p285 = scmp.ne.s32.totalorder %s276, %s277
      %p286 = scmp.eq.s32.totalorder %s37, 0
      %p287 = por %p285, %p286
      %p288 = scmp.ne.s32.totalorder %s276, %s277
      %p289 = scmp.eq.s32.totalorder %s38, 1
      %p290 = por %p288, %p289
      %p292 = scmp.ne.s32.totalorder %s277, %s291
      %p293 = scmp.eq.s32.totalorder %s38, 0
      %p294 = por %p292, %p293
      %s296 = sadd.s32 %s295, 1
      %p299 = scmp.eq.s32.totalorder %s32, 1
      %p300 = scmp.ne.s32.totalorder %s295, %s297
      %p301 = scmp.eq.s32.totalorder %s32, 0
      %p302 = por %p300, %p301
      %p303 = scmp.ne.s32.totalorder %s295, %s297
      %p304 = scmp.eq.s32.totalorder %s37, 1
      %p305 = por %p303, %p304
      %p306 = scmp.ne.s32.totalorder %s297, %s298
      %p307 = scmp.eq.s32.totalorder %s37, 0
      %p308 = por %p306, %p307
      %p309 = scmp.ne.s32.totalorder %s297, %s298
      %p310 = scmp.eq.s32.totalorder %s38, 1
      %p311 = por %p309, %p310
      %p313 = scmp.ne.s32.totalorder %s298, %s312
      %p314 = scmp.eq.s32.totalorder %s38, 0
      %p315 = por %p313, %p314
      %s317 = sadd.s32 %s316, 1
      %p320 = scmp.eq.s32.totalorder %s32, 1
      %p321 = scmp.ne.s32.totalorder %s316, %s318
      %p322 = scmp.eq.s32.totalorder %s32, 0
      %p323 = por %p321, %p322
      %p324 = scmp.ne.s32.totalorder %s316, %s318
      %p325 = scmp.eq.s32.totalorder %s37, 1
      %p326 = por %p324, %p325
      %p327 = scmp.ne.s32.totalorder %s318, %s319
      %p328 = scmp.eq.s32.totalorder %s37, 0
      %p329 = por %p327, %p328
      %p330 = scmp.ne.s32.totalorder %s318, %s319
      %p331 = scmp.eq.s32.totalorder %s38, 1
      %p332 = por %p330, %p331
      %p334 = scmp.ne.s32.totalorder %s319, %s333
      %p335 = scmp.eq.s32.totalorder %s38, 0
      %p336 = por %p334, %p335
      %s338 = sadd.s32 %s337, 1
      %p341 = scmp.eq.s32.totalorder %s32, 1
      %p342 = scmp.ne.s32.totalorder %s337, %s339
      %p343 = scmp.eq.s32.totalorder %s32, 0
      %p344 = por %p342, %p343
      %p345 = scmp.ne.s32.totalorder %s337, %s339
      %p346 = scmp.eq.s32.totalorder %s37, 1
      %p347 = por %p345, %p346
      %p348 = scmp.ne.s32.totalorder %s339, %s340
      %p349 = scmp.eq.s32.totalorder %s37, 0
      %p350 = por %p348, %p349
      %p351 = scmp.ne.s32.totalorder %s339, %s340
      %p352 = scmp.eq.s32.totalorder %s38, 1
      %p353 = por %p351, %p352
      %p355 = scmp.ne.s32.totalorder %s340, %s354
      %p356 = scmp.eq.s32.totalorder %s38, 0
      %p357 = por %p355, %p356
      %s359 = sadd.s32 %s358, 1
      %p362 = scmp.eq.s32.totalorder %s32, 1
      %p363 = scmp.ne.s32.totalorder %s358, %s360
      %p364 = scmp.eq.s32.totalorder %s32, 0
      %p365 = por %p363, %p364
      %p366 = scmp.ne.s32.totalorder %s358, %s360
      %p367 = scmp.eq.s32.totalorder %s37, 1
      %p368 = por %p366, %p367
      %p369 = scmp.ne.s32.totalorder %s360, %s361
      %p370 = scmp.eq.s32.totalorder %s37, 0
      %p371 = por %p369, %p370
      %p372 = scmp.ne.s32.totalorder %s360, %s361
      %p373 = scmp.eq.s32.totalorder %s38, 1
      %p374 = por %p372, %p373
      %p376 = scmp.ne.s32.totalorder %s361, %s375
      %p377 = scmp.eq.s32.totalorder %s38, 0
      %p378 = por %p376, %p377
      %s380 = sadd.s32 %s379, 1
      %p383 = scmp.eq.s32.totalorder %s32, 1
      %p384 = scmp.ne.s32.totalorder %s379, %s381
      %p385 = scmp.eq.s32.totalorder %s32, 0
      %p386 = por %p384, %p385
      %p387 = scmp.ne.s32.totalorder %s379, %s381
      %p388 = scmp.eq.s32.totalorder %s37, 1
      %p389 = por %p387, %p388
      %p390 = scmp.ne.s32.totalorder %s381, %s382
      %p391 = scmp.eq.s32.totalorder %s37, 0
      %p392 = por %p390, %p391
      %p393 = scmp.ne.s32.totalorder %s381, %s382
      %p394 = scmp.eq.s32.totalorder %s38, 1
      %p395 = por %p393, %p394
      %p397 = scmp.ne.s32.totalorder %s382, %s396
      %p398 = scmp.eq.s32.totalorder %s38, 0
      %p399 = por %p397, %p398
      %s401 = sadd.s32 %s400, 1
      %p404 = scmp.eq.s32.totalorder %s32, 1
      %p405 = scmp.ne.s32.totalorder %s400, %s402
      %p406 = scmp.eq.s32.totalorder %s32, 0
      %p407 = por %p405, %p406
      %p408 = scmp.ne.s32.totalorder %s400, %s402
      %p409 = scmp.eq.s32.totalorder %s37, 1
      %p410 = por %p408, %p409
      %p411 = scmp.ne.s32.totalorder %s402, %s403
      %p412 = scmp.eq.s32.totalorder %s37, 0
      %p413 = por %p411, %p412
      %p414 = scmp.ne.s32.totalorder %s402, %s403
      %p415 = scmp.eq.s32.totalorder %s38, 1
      %p416 = por %p414, %p415
      %p418 = scmp.ne.s32.totalorder %s403, %s417
      %p419 = scmp.eq.s32.totalorder %s38, 0
      %p420 = por %p418, %p419
      %s422 = sadd.s32 %s421, 1
      %p425 = scmp.eq.s32.totalorder %s32, 1
      %p426 = scmp.ne.s32.totalorder %s421, %s423
      %p427 = scmp.eq.s32.totalorder %s32, 0
      %p428 = por %p426, %p427
      %p429 = scmp.ne.s32.totalorder %s421, %s423
      %p430 = scmp.eq.s32.totalorder %s37, 1
      %p431 = por %p429, %p430
      %p432 = scmp.ne.s32.totalorder %s423, %s424
      %p433 = scmp.eq.s32.totalorder %s37, 0
      %p434 = por %p432, %p433
      %p435 = scmp.ne.s32.totalorder %s423, %s424
      %p436 = scmp.eq.s32.totalorder %s38, 1
      %p437 = por %p435, %p436
      %p439 = scmp.ne.s32.totalorder %s424, %s438
      %p440 = scmp.eq.s32.totalorder %s38, 0
      %p441 = por %p439, %p440
      %s442 = ssub.s32 %s39, %s51
      %s443 = ssub.s32 %s40, %s47
      %s444 = sor.u32 %s442, %s443
      %p445 = scmp.eq.s32.totalorder %s444, 0
      %s447 = sadd.s32 %s446, 1
      %s448 = scalar_select %p445, %s446, %s447
      %p451 = pneg %p445
      %p452 = scmp.eq.s32.totalorder %s32, 1
      %p453 = por %p451, %p452
      %p454 = scmp.ne.s32.totalorder %s446, %s449
      %p455 = scmp.eq.s32.totalorder %s32, 0
      %p456 = por %p454, %p455
      %p457 = scmp.ne.s32.totalorder %s446, %s449
      %p458 = scmp.eq.s32.totalorder %s37, 1
      %p459 = por %p457, %p458
      %p460 = scmp.ne.s32.totalorder %s449, %s450
      %p461 = scmp.eq.s32.totalorder %s37, 0
      %p462 = por %p460, %p461
      %p463 = scmp.ne.s32.totalorder %s449, %s450
      %p464 = scmp.eq.s32.totalorder %s38, 1
      %p465 = por %p463, %p464
      %p467 = scmp.ne.s32.totalorder %s450, %s466
      %p468 = scmp.eq.s32.totalorder %s38, 0
      %p469 = por %p467, %p468
      %p470 = scmp.le.s32.totalorder 1, %s32
      %p471 = scmp.lt.s32.totalorder %s32, 3
      %p472 = pnand %p470, %p471
      %p473 = pneg %p472
      // Predicated region
      $region9: #{tpu_custom_call.1} parent=5 // pred_check
        _
      $region10: #{tpu_custom_call.1} parent=5 // pred_check_branch
        %475 = sbr.rel (%p472) target = $region12
      $region11: #{tpu_custom_call.1} parent=5 // pred_region
        %s476 = ssub.s32 %s32, 1
        // Predicated region
        $region13: #{tpu_custom_call.1} parent=11 // pred_check
          %p477 = pneg %p119
        $region14: #{tpu_custom_call.1} parent=11 // pred_check_branch
          %479 = sbr.rel (%p477) target = $region16
        $region15: #{tpu_custom_call.1} parent=11 // pred_region
          _
        $region16: #{tpu_custom_call.1} parent=11 // pred_fallthru
          _
        // Predicated region
        $region17: #{tpu_custom_call.1} parent=11 // pred_check
          %p480 = pneg %p140
        $region18: #{tpu_custom_call.1} parent=11 // pred_check_branch
          %482 = sbr.rel (%p480) target = $region20
        $region19: #{tpu_custom_call.1} parent=11 // pred_region
          _
        $region20: #{tpu_custom_call.1} parent=11 // pred_fallthru
          _
        // Predicated region
        $region21: #{tpu_custom_call.1} parent=11 // pred_check
          %p483 = pneg %p161
        $region22: #{tpu_custom_call.1} parent=11 // pred_check_branch
          %485 = sbr.rel (%p483) target = $region24
        $region23: #{tpu_custom_call.1} parent=11 // pred_region
          _
        $region24: #{tpu_custom_call.1} parent=11 // pred_fallthru
          _
        // Predicated region
        $region25: #{tpu_custom_call.1} parent=11 // pred_check
          %p486 = pneg %p182
        $region26: #{tpu_custom_call.1} parent=11 // pred_check_branch
          %488 = sbr.rel (%p486) target = $region28
        $region27: #{tpu_custom_call.1} parent=11 // pred_region
          _
        $region28: #{tpu_custom_call.1} parent=11 // pred_fallthru
          _
        // Predicated region
        $region29: #{tpu_custom_call.1} parent=11 // pred_check
          %p489 = pneg %p203
        $region30: #{tpu_custom_call.1} parent=11 // pred_check_branch
          %491 = sbr.rel (%p489) target = $region32
        $region31: #{tpu_custom_call.1} parent=11 // pred_region
          %s493 = ssub.s32 256, 256
          %494 = vsyncadd [#allocation8], %s493
          %s495 = sshll.u32 [#allocation7], 4
          %s496 = int_to_ptr.vmem [resolvable:$true] %s495
          %501 = dma.hbm_to_vmem [thread:$0]  %s6, 256, %s496, [#allocation8], 64, 64, 4
        $region32: #{tpu_custom_call.1} parent=11 // pred_fallthru
          _
        // Predicated region
        $region33: #{tpu_custom_call.1} parent=11 // pred_check
          %p502 = pneg %p224
        $region34: #{tpu_custom_call.1} parent=11 // pred_check_branch
          %504 = sbr.rel (%p502) target = $region36
        $region35: #{tpu_custom_call.1} parent=11 // pred_region
          %s506 = ssub.s32 16, 16
          %507 = vsyncadd [#allocation8], %s506
          %s509 = sshll.u32 [#allocation9], 4
          %s510 = int_to_ptr.vmem [resolvable:$true] %s509
          %512 = dma.hbm_to_vmem [thread:$0]  %s7, 16, %s510, [#allocation8]
        $region36: #{tpu_custom_call.1} parent=11 // pred_fallthru
          _
        // Predicated region
        $region37: #{tpu_custom_call.1} parent=11 // pred_check
          %p513 = pneg %p245
        $region38: #{tpu_custom_call.1} parent=11 // pred_check_branch
          %515 = sbr.rel (%p513) target = $region40
        $region39: #{tpu_custom_call.1} parent=11 // pred_region
          %s517 = ssub.s32 256, 256
          %518 = vsyncadd [#allocation11], %s517
          %s519 = sshll.u32 [#allocation10], 4
          %s520 = int_to_ptr.vmem [resolvable:$true] %s519
          %525 = dma.hbm_to_vmem [thread:$0]  %s8, 256, %s520, [#allocation11], 64, 64, 4
        $region40: #{tpu_custom_call.1} parent=11 // pred_fallthru
          _
        // Predicated region
        $region41: #{tpu_custom_call.1} parent=11 // pred_check
          %p526 = pneg %p266
        $region42: #{tpu_custom_call.1} parent=11 // pred_check_branch
          %528 = sbr.rel (%p526) target = $region44
        $region43: #{tpu_custom_call.1} parent=11 // pred_region
          %s530 = ssub.s32 16, 16
          %531 = vsyncadd [#allocation11], %s530
          %s533 = sshll.u32 [#allocation12], 4
          %s534 = int_to_ptr.vmem [resolvable:$true] %s533
          %536 = dma.hbm_to_vmem [thread:$0]  %s9, 16, %s534, [#allocation11]
        $region44: #{tpu_custom_call.1} parent=11 // pred_fallthru
          _
        // Predicated region
        $region45: #{tpu_custom_call.1} parent=11 // pred_check
          %p537 = pneg %p287
        $region46: #{tpu_custom_call.1} parent=11 // pred_check_branch
          %539 = sbr.rel (%p537) target = $region48
        $region47: #{tpu_custom_call.1} parent=11 // pred_region
          _
        $region48: #{tpu_custom_call.1} parent=11 // pred_fallthru
          _
        // Predicated region
        $region49: #{tpu_custom_call.1} parent=11 // pred_check
          %p540 = pneg %p308
        $region50: #{tpu_custom_call.1} parent=11 // pred_check_branch
          %542 = sbr.rel (%p540) target = $region52
        $region51: #{tpu_custom_call.1} parent=11 // pred_region
          _
        $region52: #{tpu_custom_call.1} parent=11 // pred_fallthru
          _
        // Predicated region
        $region53: #{tpu_custom_call.1} parent=11 // pred_check
          %p543 = pneg %p329
        $region54: #{tpu_custom_call.1} parent=11 // pred_check_branch
          %545 = sbr.rel (%p543) target = $region56
        $region55: #{tpu_custom_call.1} parent=11 // pred_region
          _
        $region56: #{tpu_custom_call.1} parent=11 // pred_fallthru
          _
        // Predicated region
        $region57: #{tpu_custom_call.1} parent=11 // pred_check
          %p546 = pneg %p350
        $region58: #{tpu_custom_call.1} parent=11 // pred_check_branch
          %548 = sbr.rel (%p546) target = $region60
        $region59: #{tpu_custom_call.1} parent=11 // pred_region
          _
        $region60: #{tpu_custom_call.1} parent=11 // pred_fallthru
          _
        // Predicated region
        $region61: #{tpu_custom_call.1} parent=11 // pred_check
          %p549 = pneg %p371
        $region62: #{tpu_custom_call.1} parent=11 // pred_check_branch
          %551 = sbr.rel (%p549) target = $region64
        $region63: #{tpu_custom_call.1} parent=11 // pred_region
          _
        $region64: #{tpu_custom_call.1} parent=11 // pred_fallthru
          _
        // Predicated region
        $region65: #{tpu_custom_call.1} parent=11 // pred_check
          %p552 = pneg %p392
        $region66: #{tpu_custom_call.1} parent=11 // pred_check_branch
          %554 = sbr.rel (%p552) target = $region68
        $region67: #{tpu_custom_call.1} parent=11 // pred_region
          _
        $region68: #{tpu_custom_call.1} parent=11 // pred_fallthru
          _
        // Predicated region
        $region69: #{tpu_custom_call.1} parent=11 // pred_check
          %p555 = pneg %p413
        $region70: #{tpu_custom_call.1} parent=11 // pred_check_branch
          %557 = sbr.rel (%p555) target = $region72
        $region71: #{tpu_custom_call.1} parent=11 // pred_region
          _
        $region72: #{tpu_custom_call.1} parent=11 // pred_fallthru
          _
        // Predicated region
        $region73: #{tpu_custom_call.1} parent=11 // pred_check
          %p558 = pneg %p434
        $region74: #{tpu_custom_call.1} parent=11 // pred_check_branch
          %560 = sbr.rel (%p558) target = $region76
        $region75: #{tpu_custom_call.1} parent=11 // pred_region
          _
        $region76: #{tpu_custom_call.1} parent=11 // pred_fallthru
          _
      $region12: #{tpu_custom_call.1} parent=5 // pred_fallthru
        _
      %p561 = scmp.lt.s32.totalorder %s32, 2
      // Predicated region
      $region77: #{tpu_custom_call.1} parent=5 // pred_check
        %p562 = pneg %p561
      $region78: #{tpu_custom_call.1} parent=5 // pred_check_branch
        %564 = sbr.rel (%p562) target = $region80
      $region79: #{tpu_custom_call.1} parent=5 // pred_region
        // Predicated region
        $region81: #{tpu_custom_call.1} parent=79 // pred_check
          %p565 = pneg %p64
        $region82: #{tpu_custom_call.1} parent=79 // pred_check_branch
          %567 = sbr.rel (%p565) target = $region84
        $region83: #{tpu_custom_call.1} parent=79 // pred_region
          %p568 = scmp.lt.s32.totalorder %s39, 1
          %s569 = scalar_select %p568, %s39, 1
          %s570 = smul.addr %s569, 8
          %s571 = scalar_lea.vmem %s0, %s570
        $region84: #{tpu_custom_call.1} parent=79 // pred_fallthru
          _
        // Predicated region
        $region85: #{tpu_custom_call.1} parent=79 // pred_check
          %p572 = pneg %p92
        $region86: #{tpu_custom_call.1} parent=79 // pred_check_branch
          %574 = sbr.rel (%p572) target = $region88
        $region87: #{tpu_custom_call.1} parent=79 // pred_region
          %s575 = sand.u32 %s82, 1
          %s576 = scalar_lea.sflag [#allocation5], %s575
          %s577 = sand.u32 %s82, 1
          %s578 = smul.addr %s577, 4
          %s579 = scalar_lea.vmem [#allocation4], %s578
          %s581 = ssub.s32 64, 64
          %582 = vsyncadd %s576, %s581
          %s583 = sadd.s32 %s40, %s39
          %s584 = smul.addr %s583, 64
          %s585 = scalar_lea.hbm %s1, %s584
          %s587 = sshll.u32 %s579, 4
          %s588 = int_to_ptr.vmem [resolvable:$true] %s587
          %590 = dma.hbm_to_vmem [thread:$0]  %s585, 64, %s588, %s576
        $region88: #{tpu_custom_call.1} parent=79 // pred_fallthru
          _
      $region80: #{tpu_custom_call.1} parent=5 // pred_fallthru
        _
      %p591 = scmp.le.s32.totalorder 1, %s32
      %p592 = scmp.lt.s32.totalorder %s32, 3
      %p593 = pnand %p591, %p592
      %p594 = pneg %p593
      // Predicated region
      $region89: #{tpu_custom_call.1} parent=5 // pred_check
        _
      $region90: #{tpu_custom_call.1} parent=5 // pred_check_branch
        %596 = sbr.rel (%p593) target = $region92
      $region91: #{tpu_custom_call.1} parent=5 // pred_region
        %s597 = ssub.s32 %s32, 1
        %s598 = sand.u32 %s85, 1
        %s599 = scalar_lea.sflag [#allocation5], %s598
        %s600 = sand.u32 %s85, 1
        %s601 = smul.addr %s600, 4
        %s602 = scalar_lea.vmem [#allocation4], %s601
        // Predicated region
        $region93: #{tpu_custom_call.1} parent=91 // pred_check
          %p603 = pneg %p98
        $region94: #{tpu_custom_call.1} parent=91 // pred_check_branch
          %605 = sbr.rel (%p603) target = $region96
        $region95: #{tpu_custom_call.1} parent=91 // pred_region
          %606 = dma.done %s599, 64
        $region96: #{tpu_custom_call.1} parent=91 // pred_fallthru
          _
        // Predicated region
        $region97: #{tpu_custom_call.1} parent=91 // pred_check
          %p607 = pneg %p203
        $region98: #{tpu_custom_call.1} parent=91 // pred_check_branch
          %609 = sbr.rel (%p607) target = $region100
        $region99: #{tpu_custom_call.1} parent=91 // pred_region
          %610 = dma.done [#allocation8], 256
        $region100: #{tpu_custom_call.1} parent=91 // pred_fallthru
          _
        // Predicated region
        $region101: #{tpu_custom_call.1} parent=91 // pred_check
          %p611 = pneg %p224
        $region102: #{tpu_custom_call.1} parent=91 // pred_check_branch
          %613 = sbr.rel (%p611) target = $region104
        $region103: #{tpu_custom_call.1} parent=91 // pred_region
          %614 = dma.done [#allocation8], 16
        $region104: #{tpu_custom_call.1} parent=91 // pred_fallthru
          _
        // Predicated region
        $region105: #{tpu_custom_call.1} parent=91 // pred_check
          %p615 = pneg %p245
        $region106: #{tpu_custom_call.1} parent=91 // pred_check_branch
          %617 = sbr.rel (%p615) target = $region108
        $region107: #{tpu_custom_call.1} parent=91 // pred_region
          %618 = dma.done [#allocation11], 256
        $region108: #{tpu_custom_call.1} parent=91 // pred_fallthru
          _
        // Predicated region
        $region109: #{tpu_custom_call.1} parent=91 // pred_check
          %p619 = pneg %p266
        $region110: #{tpu_custom_call.1} parent=91 // pred_check_branch
          %621 = sbr.rel (%p619) target = $region112
        $region111: #{tpu_custom_call.1} parent=91 // pred_region
          %622 = dma.done [#allocation11], 16
        $region112: #{tpu_custom_call.1} parent=91 // pred_fallthru
          _
        %p623 = scmp.lt.s32.totalorder %s41, 1
        %s624 = scalar_select %p623, %s41, 1
        %s625 = smul.addr %s624, 8
        %s626 = scalar_lea.vmem %s0, %s625
        %p627 = pneg %p70
        %p628 = pneg %p67
        %s629 = sand.u32 %s85, 1
        %s630 = scalar_lea.sflag [#allocation5], %s629
        %s631 = sand.u32 %s85, 1
        %s632 = smul.addr %s631, 4
        %s633 = scalar_lea.vmem [#allocation4], %s632
        %p634 = pneg %p98
        %p635 = pneg %p95
        %p636 = pneg %p119
        %p637 = pneg %p116
        %p638 = pneg %p140
        %p639 = pneg %p137
        %p640 = pneg %p161
        %p641 = pneg %p158
        %p642 = pneg %p182
        %p643 = pneg %p179
        %p644 = pneg %p203
        %p645 = pneg %p200
        %p646 = pneg %p224
        %p647 = pneg %p221
        %p648 = pneg %p245
        %p649 = pneg %p242
        %p650 = pneg %p266
        %p651 = pneg %p263
        %p652 = pneg %p287
        %p653 = pneg %p284
        %p654 = pneg %p308
        %p655 = pneg %p305
        %p656 = pneg %p329
        %p657 = pneg %p326
        %p658 = pneg %p350
        %p659 = pneg %p347
        %p660 = pneg %p371
        %p661 = pneg %p368
        %p662 = pneg %p392
        %p663 = pneg %p389
        %p664 = pneg %p413
        %p665 = pneg %p410
        %p666 = pneg %p434
        %p667 = pneg %p431
        %p668 = pneg %p462
        %p669 = pneg %p459
        %s670 = sand.u32 %s449, 1
        %s671 = scalar_lea.sflag [#allocation6], %s670
        %s672 = sand.u32 %s449, 1
        %s673 = smul.addr %s672, 8
        %s674 = scalar_lea.vmem [#allocation13], %s673
        %p675 = scmp.lt.s32.totalorder %s41, 1
        %s676 = scalar_select %p675, %s41, 1
        %s677 = smul.addr %s676, 8
        %s678 = scalar_lea.vmem %s0, %s677
        %v680 = vld [vmem:[%s10] sm:$0x1]
        %v681 = vld [vmem:[%s11] sm:$0x1]
        %p682 = scmp.eq.s32.totalorder %s42, 0
        // Predicated region
        $region113: #{tpu_custom_call.1} parent=91 // pred_check
          %p683 = pneg %p682
        $region114: #{tpu_custom_call.1} parent=91 // pred_check_branch
          %685 = sbr.rel (%p683) target = $region116
        $region115: #{tpu_custom_call.1} parent=91 // pred_region
          %v686 = vld [vmem:[%s678] sm:$0xff]
          %vm687 = vcmask 261120
          %v688 = vsel %vm687, %v686, 0.0
          %689 = vadd.xlane.f32.xlu0 %v688
          %v690 = vpop.xlane.xlu0 %689
          %v691 = vrcp.pop 32.0
          %v692 = vmul.f32 %v690, %v691
          %v693 = vsub.f32 %v686, %v692
          %v694 = vmul.f32 %v693, %v693
          %v695 = vsel %vm687, %v694, 0.0
          %696 = vadd.xlane.f32.xlu0 %v695
          %v697 = vpop.xlane.xlu0 %696
          %v698 = vmul.f32 %v697, %v691
          %v699 = vadd.f32 %v698, 1e-06
          %v700 = vrsqrt.pop %v699
          %v701 = vmul.f32 %v693, %v700
          %v703 = vlaneseq
          %v704 = vshrl.u32 %v703, 7
          %v705 = vsub.s32 0, %v704
          %v706 = vrot.slane %v680, %v705
          %v708 = vmul.f32 %v701, %v706
          %v710 = vlaneseq
          %v711 = vshrl.u32 %v710, 7
          %v712 = vsub.s32 0, %v711
          %v713 = vrot.slane %v681, %v712
          %v715 = vadd.f32 %v708, %v713
          %v716 = vpack.c.bf16 %v715, %v715
          %v717 = vld [vmem:[%s4] sm:$0xf]
          %v718 = vld [vmem:[%s4 + $0x4] sm:$0xf]
          %v719 = vld [vmem:[%s4 + $0x8] sm:$0xf]
          %v720 = vld [vmem:[%s4 + $0xc] sm:$0xf]
          %v721 = vld [vmem:[%s5] sm:$0x1]
          %v723 = vlaneseq
          %v724 = vshrl.u32 %v723, 7
          %v725 = vsub.s32 0, %v724
          %v726 = vrot.slane %v721, %v725
          %v732 = vunpack.c.l.b16 %v717
          %v733 = vunpack.c.l.b16 %v718
          %v734 = vunpack.c.l.b16 %v719
          %v735 = vunpack.c.l.b16 %v720
          %v736 = vpack.c.b16 %v733, %v732
          %v737 = vpack.c.b16 %v735, %v734
          %v741 = vsel %vm687, %v716, 0
          %743 = vmatprep.subr.bf16.mxu0 0
          %744 = vmatpush1.bf16.msra.mxu0 %v736
          %745 = vmatprep.subr.bf16.mxu0 0
          %746 = vmatpush1.bf16.msra.mxu0 %v737
          %747 = vmatprep.subr.bf16.mxu0 0
          %748 = vmatpush1.bf16.msra.mxu0 0
          %749 = vmatprep.subr.bf16.mxu0 0
          %750 = vmatpush1.bf16.msra.mxu0 0
          %751 = vmatprep.subr.bf16.mxu0 0
          %752 = vmatpush1.bf16.msra.mxu0 0
          %753 = vmatprep.subr.bf16.mxu0 0
          %754 = vmatpush1.bf16.msra.mxu0 0
          %755 = vmatprep.subr.bf16.mxu0 0
          %756 = vmatpush1.bf16.msra.mxu0 0
          %757 = vmatprep.subr.bf16.mxu0 0
          %758 = vmatpush1.bf16.msra.mxu0 0
          %759 = vmatprep.subr.bf16.mxu0 0
          %760 = vmatpush1.bf16.msra.mxu0 0
          %761 = vmatprep.subr.bf16.mxu0 0
          %762 = vmatpush1.bf16.msra.mxu0 0
          %763 = vmatprep.subr.bf16.mxu0 0
          %764 = vmatpush1.bf16.msra.mxu0 0
          %765 = vmatprep.subr.bf16.mxu0 0
          %766 = vmatpush1.bf16.msra.mxu0 0
          %767 = vmatprep.subr.bf16.mxu0 0
          %768 = vmatpush1.bf16.msra.mxu0 0
          %769 = vmatprep.subr.bf16.mxu0 0
          %770 = vmatpush1.bf16.msra.mxu0 0
          %771 = vmatprep.subr.bf16.mxu0 0
          %772 = vmatpush1.bf16.msra.mxu0 0
          %773 = vmatprep.subr.bf16.mxu0 0
          %774 = vmatpush1.bf16.msra.mxu0 0
          %775 = vmatprep.mubr.bf16.mxu0 0
          %776 = vmatmul.mubr.bf16.gmra.mrb[0].mxu0 %v741
          %v777 = vpop.f32.mrb[0].mxu0
          %v778 = vadd.f32 %v726, %v777
          %v779 = vpop.f32.mrb[0].mxu0
          %v780 = vpop.f32.mrb[0].mxu0
          %v781 = vpop.f32.mrb[0].mxu0
          %782 = vdwg.mxu0
          %784 = vrot.lane.b32.xlu0 %v778, 120
          %v785 = vpop.permute.xlu0 %784
          %787 = vrot.lane.b32.xlu0 %v778, 112
          %v788 = vpop.permute.xlu0 %787
          %790 = vrot.lane.b32.xlu0 %v778, 104
          %v791 = vpop.permute.xlu0 %790
          %v793 = vcombine.low %v778, %v788
          %v794 = vcombine.high %v778, %v788
          %v796 = vunpack.c.l.s4 1983009808
          %v797 = vunpack.c.0.s8 %v796
          %v798 = vlaneseq
          %v799 = vshrl.u32 %v798, 7
          %v800 = vsub.s32 %v797, %v799
          %v801 = vrot.slane %v793, %v800
          %v803 = vunpack.c.l.s4 1983009808
          %v804 = vunpack.c.0.s8 %v803
          %v805 = vlaneseq
          %v806 = vshrl.u32 %v805, 7
          %v807 = vsub.s32 %v804, %v806
          %v808 = vrot.slane %v794, %v807
          %v809 = vcombine.low %v785, %v791
          %v810 = vcombine.high %v785, %v791
          %v812 = vunpack.c.l.s4 1983009808
          %v813 = vunpack.c.0.s8 %v812
          %v814 = vlaneseq
          %v815 = vshrl.u32 %v814, 7
          %v816 = vsub.s32 %v813, %v815
          %v817 = vrot.slane %v809, %v816
          %v819 = vunpack.c.l.s4 1983009808
          %v820 = vunpack.c.0.s8 %v819
          %v821 = vlaneseq
          %v822 = vshrl.u32 %v821, 7
          %v823 = vsub.s32 %v820, %v822
          %v824 = vrot.slane %v810, %v823
          %v825 = vcombine.low %v801, %v817
          %v826 = vcombine.high %v801, %v817
          %v828 = vunpack.c.l.s4 1934713408
          %v829 = vunpack.c.0.s8 %v828
          %v830 = vlaneseq
          %v831 = vshrl.u32 %v830, 7
          %v832 = vsub.s32 %v829, %v831
          %v833 = vrot.slane %v825, %v832
          %v835 = vunpack.c.l.s4 1934713408
          %v836 = vunpack.c.0.s8 %v835
          %v837 = vlaneseq
          %v838 = vshrl.u32 %v837, 7
          %v839 = vsub.s32 %v836, %v838
          %v840 = vrot.slane %v826, %v839
          %v841 = vcombine.low %v808, %v824
          %v842 = vcombine.high %v808, %v824
          %v844 = vunpack.c.l.s4 1934713408
          %v845 = vunpack.c.0.s8 %v844
          %v846 = vlaneseq
          %v847 = vshrl.u32 %v846, 7
          %v848 = vsub.s32 %v845, %v847
          %v849 = vrot.slane %v841, %v848
          %v851 = vunpack.c.l.s4 1934713408
          %v852 = vunpack.c.0.s8 %v851
          %v853 = vlaneseq
          %v854 = vshrl.u32 %v853, 7
          %v855 = vsub.s32 %v852, %v854
          %v856 = vrot.slane %v842, %v855
          %v857 = vcombine.high %v833, 0.0
          %v858 = vcombine.high %v840, 0.0
          %v859 = vcombine.high %v849, 0.0
          %v860 = vcombine.high %v856, 0.0
          %v861 = vpack.c.bf16 %v833, %v833
          %v862 = vpack.c.bf16 %v857, %v857
          %v863 = vpack.c.bf16 %v840, %v840
          %v864 = vpack.c.bf16 %v858, %v858
          %v865 = vpack.c.bf16 %v849, %v849
          %v866 = vpack.c.bf16 %v859, %v859
          %v867 = vpack.c.bf16 %v856, %v856
          %v868 = vpack.c.bf16 %v860, %v860
          %vm869 = vcmask 58368
          %870 = vst.msk [vmem:[#allocation2] sm:$0x3] %vm869, %v861
          %871 = vst.msk [vmem:[#allocation2 + $0x2] sm:$0x3] %vm869, %v862
          %872 = vst.msk [vmem:[#allocation2 + $0x4] sm:$0x3] %vm869, %v863
          %873 = vst.msk [vmem:[#allocation2 + $0x6] sm:$0x3] %vm869, %v864
          %874 = vst.msk [vmem:[#allocation2 + $0x8] sm:$0x3] %vm869, %v865
          %875 = vst.msk [vmem:[#allocation2 + $0xa] sm:$0x3] %vm869, %v866
          %876 = vst.msk [vmem:[#allocation2 + $0xc] sm:$0x3] %vm869, %v867
          %877 = vst.msk [vmem:[#allocation2 + $0xe] sm:$0x3] %vm869, %v868
          %v878 = vld [vmem:[#allocation7] sm:$0xf]
          %v879 = vld [vmem:[#allocation7 + $0x4] sm:$0xf]
          %v880 = vld [vmem:[#allocation7 + $0x8] sm:$0xf]
          %v881 = vld [vmem:[#allocation7 + $0xc] sm:$0xf]
          %v882 = vld [vmem:[#allocation9] sm:$0x1]
          %v884 = vlaneseq
          %v885 = vshrl.u32 %v884, 7
          %v886 = vsub.s32 0, %v885
          %v887 = vrot.slane %v882, %v886
          %v893 = vunpack.c.l.b16 %v878
          %v894 = vunpack.c.l.b16 %v879
          %v895 = vunpack.c.l.b16 %v880
          %v896 = vunpack.c.l.b16 %v881
          %v897 = vpack.c.b16 %v894, %v893
          %v898 = vpack.c.b16 %v896, %v895
          %901 = vmatprep.subr.bf16.mxu0 0
          %902 = vmatpush1.bf16.msra.mxu0 %v897
          %903 = vmatprep.subr.bf16.mxu0 0
          %904 = vmatpush1.bf16.msra.mxu0 %v898
          %905 = vmatprep.subr.bf16.mxu0 0
          %906 = vmatpush1.bf16.msra.mxu0 0
          %907 = vmatprep.subr.bf16.mxu0 0
          %908 = vmatpush1.bf16.msra.mxu0 0
          %909 = vmatprep.subr.bf16.mxu0 0
          %910 = vmatpush1.bf16.msra.mxu0 0
          %911 = vmatprep.subr.bf16.mxu0 0
          %912 = vmatpush1.bf16.msra.mxu0 0
          %913 = vmatprep.subr.bf16.mxu0 0
          %914 = vmatpush1.bf16.msra.mxu0 0
          %915 = vmatprep.subr.bf16.mxu0 0
          %916 = vmatpush1.bf16.msra.mxu0 0
          %917 = vmatprep.subr.bf16.mxu0 0
          %918 = vmatpush1.bf16.msra.mxu0 0
          %919 = vmatprep.subr.bf16.mxu0 0
          %920 = vmatpush1.bf16.msra.mxu0 0
          %921 = vmatprep.subr.bf16.mxu0 0
          %922 = vmatpush1.bf16.msra.mxu0 0
          %923 = vmatprep.subr.bf16.mxu0 0
          %924 = vmatpush1.bf16.msra.mxu0 0
          %925 = vmatprep.subr.bf16.mxu0 0
          %926 = vmatpush1.bf16.msra.mxu0 0
          %927 = vmatprep.subr.bf16.mxu0 0
          %928 = vmatpush1.bf16.msra.mxu0 0
          %929 = vmatprep.subr.bf16.mxu0 0
          %930 = vmatpush1.bf16.msra.mxu0 0
          %931 = vmatprep.subr.bf16.mxu0 0
          %932 = vmatpush1.bf16.msra.mxu0 0
          %933 = vmatprep.mubr.bf16.mxu0 0
          %934 = vmatmul.mubr.bf16.gmra.mrb[0].mxu0 %v741
          %v935 = vpop.f32.mrb[0].mxu0
          %v936 = vadd.f32 %v887, %v935
          %v937 = vpop.f32.mrb[0].mxu0
          %v938 = vpop.f32.mrb[0].mxu0
          %v939 = vpop.f32.mrb[0].mxu0
          %940 = vdwg.mxu0
          %942 = vrot.lane.b32.xlu0 %v936, 120
          %v943 = vpop.permute.xlu0 %942
          %945 = vrot.lane.b32.xlu0 %v936, 112
          %v946 = vpop.permute.xlu0 %945
          %948 = vrot.lane.b32.xlu0 %v936, 104
          %v949 = vpop.permute.xlu0 %948
          %v951 = vcombine.low %v936, %v946
          %v952 = vcombine.high %v936, %v946
          %v954 = vunpack.c.l.s4 1983009808
          %v955 = vunpack.c.0.s8 %v954
          %v956 = vlaneseq
          %v957 = vshrl.u32 %v956, 7
          %v958 = vsub.s32 %v955, %v957
          %v959 = vrot.slane %v951, %v958
          %v961 = vunpack.c.l.s4 1983009808
          %v962 = vunpack.c.0.s8 %v961
          %v963 = vlaneseq
          %v964 = vshrl.u32 %v963, 7
          %v965 = vsub.s32 %v962, %v964
          %v966 = vrot.slane %v952, %v965
          %v967 = vcombine.low %v943, %v949
          %v968 = vcombine.high %v943, %v949
          %v970 = vunpack.c.l.s4 1983009808
          %v971 = vunpack.c.0.s8 %v970
          %v972 = vlaneseq
          %v973 = vshrl.u32 %v972, 7
          %v974 = vsub.s32 %v971, %v973
          %v975 = vrot.slane %v967, %v974
          %v977 = vunpack.c.l.s4 1983009808
          %v978 = vunpack.c.0.s8 %v977
          %v979 = vlaneseq
          %v980 = vshrl.u32 %v979, 7
          %v981 = vsub.s32 %v978, %v980
          %v982 = vrot.slane %v968, %v981
          %v983 = vcombine.low %v959, %v975
          %v984 = vcombine.high %v959, %v975
          %v986 = vunpack.c.l.s4 1934713408
          %v987 = vunpack.c.0.s8 %v986
          %v988 = vlaneseq
          %v989 = vshrl.u32 %v988, 7
          %v990 = vsub.s32 %v987, %v989
          %v991 = vrot.slane %v983, %v990
          %v993 = vunpack.c.l.s4 1934713408
          %v994 = vunpack.c.0.s8 %v993
          %v995 = vlaneseq
          %v996 = vshrl.u32 %v995, 7
          %v997 = vsub.s32 %v994, %v996
          %v998 = vrot.slane %v984, %v997
          %v999 = vcombine.low %v966, %v982
          %v1000 = vcombine.high %v966, %v982
          %v1002 = vunpack.c.l.s4 1934713408
          %v1003 = vunpack.c.0.s8 %v1002
          %v1004 = vlaneseq
          %v1005 = vshrl.u32 %v1004, 7
          %v1006 = vsub.s32 %v1003, %v1005
          %v1007 = vrot.slane %v999, %v1006
          %v1009 = vunpack.c.l.s4 1934713408
          %v1010 = vunpack.c.0.s8 %v1009
          %v1011 = vlaneseq
          %v1012 = vshrl.u32 %v1011, 7
          %v1013 = vsub.s32 %v1010, %v1012
          %v1014 = vrot.slane %v1000, %v1013
          %v1015 = vcombine.high %v991, 0.0
          %v1016 = vcombine.high %v998, 0.0
          %v1017 = vcombine.high %v1007, 0.0
          %v1018 = vcombine.high %v1014, 0.0
          %v1019 = vpack.c.bf16 %v991, %v991
          %v1020 = vpack.c.bf16 %v1015, %v1015
          %v1021 = vpack.c.bf16 %v998, %v998
          %v1022 = vpack.c.bf16 %v1016, %v1016
          %v1023 = vpack.c.bf16 %v1007, %v1007
          %v1024 = vpack.c.bf16 %v1017, %v1017
          %v1025 = vpack.c.bf16 %v1014, %v1014
          %v1026 = vpack.c.bf16 %v1018, %v1018
          %1027 = vst.msk [vmem:[#allocation3] sm:$0x3] %vm869, %v1019
          %1028 = vst.msk [vmem:[#allocation3 + $0x2] sm:$0x3] %vm869, %v1020
          %1029 = vst.msk [vmem:[#allocation3 + $0x4] sm:$0x3] %vm869, %v1021
          %1030 = vst.msk [vmem:[#allocation3 + $0x6] sm:$0x3] %vm869, %v1022
          %1031 = vst.msk [vmem:[#allocation3 + $0x8] sm:$0x3] %vm869, %v1023
          %1032 = vst.msk [vmem:[#allocation3 + $0xa] sm:$0x3] %vm869, %v1024
          %1033 = vst.msk [vmem:[#allocation3 + $0xc] sm:$0x3] %vm869, %v1025
          %1034 = vst.msk [vmem:[#allocation3 + $0xe] sm:$0x3] %vm869, %v1026
        $region116: #{tpu_custom_call.1} parent=91 // pred_fallthru
          _
        %s1035 = smul.u32 %s42, 8
        %s1036 = scalar_lea.vmem %s678, %s1035
        %v1037 = vld [vmem:[%s1036] sm:$0xff]
        %vm1038 = vcmask 261120
        %v1039 = vsel %vm1038, %v1037, 0.0
        %1040 = vadd.xlane.f32.xlu0 %v1039
        %v1041 = vpop.xlane.xlu0 %1040
        %v1042 = vrcp.pop 32.0
        %v1043 = vmul.f32 %v1041, %v1042
        %v1044 = vsub.f32 %v1037, %v1043
        %v1045 = vmul.f32 %v1044, %v1044
        %v1046 = vsel %vm1038, %v1045, 0.0
        %1047 = vadd.xlane.f32.xlu0 %v1046
        %v1048 = vpop.xlane.xlu0 %1047
        %v1049 = vmul.f32 %v1048, %v1042
        %v1050 = vadd.f32 %v1049, 1e-06
        %v1051 = vrsqrt.pop %v1050
        %v1052 = vmul.f32 %v1044, %v1051
        %v1054 = vlaneseq
        %v1055 = vshrl.u32 %v1054, 7
        %v1056 = vsub.s32 0, %v1055
        %v1057 = vrot.slane %v680, %v1056
        %v1059 = vmul.f32 %v1052, %v1057
        %v1061 = vlaneseq
        %v1062 = vshrl.u32 %v1061, 7
        %v1063 = vsub.s32 0, %v1062
        %v1064 = vrot.slane %v681, %v1063
        %v1066 = vadd.f32 %v1059, %v1064
        %v1067 = vpack.c.bf16 %v1066, %v1066
        %v1068 = vld [vmem:[%s2] sm:$0xf]
        %v1069 = vld [vmem:[%s2 + $0x4] sm:$0xf]
        %v1070 = vld [vmem:[%s2 + $0x8] sm:$0xf]
        %v1071 = vld [vmem:[%s2 + $0xc] sm:$0xf]
        %v1072 = vld [vmem:[%s3] sm:$0x1]
        %v1074 = vlaneseq
        %v1075 = vshrl.u32 %v1074, 7
        %v1076 = vsub.s32 0, %v1075
        %v1077 = vrot.slane %v1072, %v1076
        %v1083 = vunpack.c.l.b16 %v1068
        %v1084 = vunpack.c.l.b16 %v1069
        %v1085 = vunpack.c.l.b16 %v1070
        %v1086 = vunpack.c.l.b16 %v1071
        %v1087 = vpack.c.b16 %v1084, %v1083
        %v1088 = vpack.c.b16 %v1086, %v1085
        %v1092 = vsel %vm1038, %v1067, 0
        %1094 = vmatprep.subr.bf16.mxu0 0
        %1095 = vmatpush1.bf16.msra.mxu0 %v1087
        %1096 = vmatprep.subr.bf16.mxu0 0
        %1097 = vmatpush1.bf16.msra.mxu0 %v1088
        %1098 = vmatprep.subr.bf16.mxu0 0
        %1099 = vmatpush1.bf16.msra.mxu0 0
        %1100 = vmatprep.subr.bf16.mxu0 0
        %1101 = vmatpush1.bf16.msra.mxu0 0
        %1102 = vmatprep.subr.bf16.mxu0 0
        %1103 = vmatpush1.bf16.msra.mxu0 0
        %1104 = vmatprep.subr.bf16.mxu0 0
        %1105 = vmatpush1.bf16.msra.mxu0 0
        %1106 = vmatprep.subr.bf16.mxu0 0
        %1107 = vmatpush1.bf16.msra.mxu0 0
        %1108 = vmatprep.subr.bf16.mxu0 0
        %1109 = vmatpush1.bf16.msra.mxu0 0
        %1110 = vmatprep.subr.bf16.mxu0 0
        %1111 = vmatpush1.bf16.msra.mxu0 0
        %1112 = vmatprep.subr.bf16.mxu0 0
        %1113 = vmatpush1.bf16.msra.mxu0 0
        %1114 = vmatprep.subr.bf16.mxu0 0
        %1115 = vmatpush1.bf16.msra.mxu0 0
        %1116 = vmatprep.subr.bf16.mxu0 0
        %1117 = vmatpush1.bf16.msra.mxu0 0
        %1118 = vmatprep.subr.bf16.mxu0 0
        %1119 = vmatpush1.bf16.msra.mxu0 0
        %1120 = vmatprep.subr.bf16.mxu0 0
        %1121 = vmatpush1.bf16.msra.mxu0 0
        %1122 = vmatprep.subr.bf16.mxu0 0
        %1123 = vmatpush1.bf16.msra.mxu0 0
        %1124 = vmatprep.subr.bf16.mxu0 0
        %1125 = vmatpush1.bf16.msra.mxu0 0
        %1126 = vmatprep.mubr.bf16.mxu0 0
        %1127 = vmatmul.mubr.bf16.gmra.mrb[0].mxu0 %v1092
        %v1128 = vpop.f32.mrb[0].mxu0
        %v1129 = vadd.f32 %v1077, %v1128
        %v1130 = vpop.f32.mrb[0].mxu0
        %v1131 = vpop.f32.mrb[0].mxu0
        %v1132 = vpop.f32.mrb[0].mxu0
        %1133 = vdwg.mxu0
        %v1134 = vmul.f32 %v1129, 0.35355338
        %1136 = vrot.lane.b32.xlu0 %v1134, 120
        %v1137 = vpop.permute.xlu0 %1136
        %1139 = vrot.lane.b32.xlu0 %v1134, 112
        %v1140 = vpop.permute.xlu0 %1139
        %1142 = vrot.lane.b32.xlu0 %v1134, 104
        %v1143 = vpop.permute.xlu0 %1142
        %v1145 = vcombine.low %v1134, %v1140
        %v1146 = vcombine.high %v1134, %v1140
        %v1148 = vunpack.c.l.s4 1983009808
        %v1149 = vunpack.c.0.s8 %v1148
        %v1150 = vlaneseq
        %v1151 = vshrl.u32 %v1150, 7
        %v1152 = vsub.s32 %v1149, %v1151
        %v1153 = vrot.slane %v1145, %v1152
        %v1155 = vunpack.c.l.s4 1983009808
        %v1156 = vunpack.c.0.s8 %v1155
        %v1157 = vlaneseq
        %v1158 = vshrl.u32 %v1157, 7
        %v1159 = vsub.s32 %v1156, %v1158
        %v1160 = vrot.slane %v1146, %v1159
        %v1161 = vcombine.low %v1137, %v1143
        %v1162 = vcombine.high %v1137, %v1143
        %v1164 = vunpack.c.l.s4 1983009808
        %v1165 = vunpack.c.0.s8 %v1164
        %v1166 = vlaneseq
        %v1167 = vshrl.u32 %v1166, 7
        %v1168 = vsub.s32 %v1165, %v1167
        %v1169 = vrot.slane %v1161, %v1168
        %v1171 = vunpack.c.l.s4 1983009808
        %v1172 = vunpack.c.0.s8 %v1171
        %v1173 = vlaneseq
        %v1174 = vshrl.u32 %v1173, 7
        %v1175 = vsub.s32 %v1172, %v1174
        %v1176 = vrot.slane %v1162, %v1175
        %v1177 = vcombine.low %v1153, %v1169
        %v1178 = vcombine.high %v1153, %v1169
        %v1180 = vunpack.c.l.s4 1934713408
        %v1181 = vunpack.c.0.s8 %v1180
        %v1182 = vlaneseq
        %v1183 = vshrl.u32 %v1182, 7
        %v1184 = vsub.s32 %v1181, %v1183
        %v1185 = vrot.slane %v1177, %v1184
        %v1187 = vunpack.c.l.s4 1934713408
        %v1188 = vunpack.c.0.s8 %v1187
        %v1189 = vlaneseq
        %v1190 = vshrl.u32 %v1189, 7
        %v1191 = vsub.s32 %v1188, %v1190
        %v1192 = vrot.slane %v1178, %v1191
        %v1193 = vcombine.low %v1160, %v1176
        %v1194 = vcombine.high %v1160, %v1176
        %v1196 = vunpack.c.l.s4 1934713408
        %v1197 = vunpack.c.0.s8 %v1196
        %v1198 = vlaneseq
        %v1199 = vshrl.u32 %v1198, 7
        %v1200 = vsub.s32 %v1197, %v1199
        %v1201 = vrot.slane %v1193, %v1200
        %v1203 = vunpack.c.l.s4 1934713408
        %v1204 = vunpack.c.0.s8 %v1203
        %v1205 = vlaneseq
        %v1206 = vshrl.u32 %v1205, 7
        %v1207 = vsub.s32 %v1204, %v1206
        %v1208 = vrot.slane %v1194, %v1207
        %v1209 = vcombine.high %v1185, 0.0
        %v1210 = vcombine.high %v1192, 0.0
        %v1211 = vcombine.high %v1201, 0.0
        %v1212 = vcombine.high %v1208, 0.0
        %v1213 = vpack.c.bf16 %v1185, %v1185
        %v1214 = vpack.c.bf16 %v1209, %v1209
        %v1215 = vpack.c.bf16 %v1192, %v1192
        %v1216 = vpack.c.bf16 %v1210, %v1210
        %v1217 = vpack.c.bf16 %v1201, %v1201
        %v1218 = vpack.c.bf16 %v1211, %v1211
        %v1219 = vpack.c.bf16 %v1208, %v1208
        %v1220 = vpack.c.bf16 %v1212, %v1212
        %v1221 = vld [vmem:[#allocation2] sm:$0x3]
        %v1222 = vld [vmem:[#allocation2 + $0x2] sm:$0x3]
        %v1223 = vld [vmem:[#allocation2 + $0x4] sm:$0x3]
        %v1224 = vld [vmem:[#allocation2 + $0x6] sm:$0x3]
        %v1225 = vld [vmem:[#allocation2 + $0x8] sm:$0x3]
        %v1226 = vld [vmem:[#allocation2 + $0xa] sm:$0x3]
        %v1227 = vld [vmem:[#allocation2 + $0xc] sm:$0x3]
        %v1228 = vld [vmem:[#allocation2 + $0xe] sm:$0x3]
        %v1229 = vld [vmem:[#allocation3] sm:$0x3]
        %v1230 = vld [vmem:[#allocation3 + $0x2] sm:$0x3]
        %v1231 = vld [vmem:[#allocation3 + $0x4] sm:$0x3]
        %v1232 = vld [vmem:[#allocation3 + $0x6] sm:$0x3]
        %v1233 = vld [vmem:[#allocation3 + $0x8] sm:$0x3]
        %v1234 = vld [vmem:[#allocation3 + $0xa] sm:$0x3]
        %v1235 = vld [vmem:[#allocation3 + $0xc] sm:$0x3]
        %v1236 = vld [vmem:[#allocation3 + $0xe] sm:$0x3]
        %v1237 = vld [vmem:[%s602] sm:$0xf]
        %v1238 = vunpack.c.l.bf16 %v1237
        %v1239 = vcombine.low %v1213, %v1217
        %v1241 = vunpack.c.l.s4 1983009808
        %v1242 = vunpack.c.0.s8 %v1241
        %v1243 = vlaneseq
        %v1244 = vshrl.u32 %v1243, 7
        %v1245 = vsub.s32 %v1242, %v1244
        %v1246 = vrot.slane %v1239, %v1245
        %v1247 = vcombine.low %v1215, %v1219
        %v1249 = vunpack.c.l.s4 1983009808
        %v1250 = vunpack.c.0.s8 %v1249
        %v1251 = vlaneseq
        %v1252 = vshrl.u32 %v1251, 7
        %v1253 = vsub.s32 %v1250, %v1252
        %v1254 = vrot.slane %v1247, %v1253
        %v1255 = vcombine.low %v1246, %v1254
        %v1257 = vunpack.c.l.s4 1934713408
        %v1258 = vunpack.c.0.s8 %v1257
        %v1259 = vlaneseq
        %v1260 = vshrl.u32 %v1259, 7
        %v1261 = vsub.s32 %v1258, %v1260
        %v1262 = vrot.slane %v1255, %v1261
        %v1263 = vcombine.high %v1262, 0
        %v1264 = vcombine.low %v1214, %v1218
        %v1266 = vunpack.c.l.s4 1983009808
        %v1267 = vunpack.c.0.s8 %v1266
        %v1268 = vlaneseq
        %v1269 = vshrl.u32 %v1268, 7
        %v1270 = vsub.s32 %v1267, %v1269
        %v1271 = vrot.slane %v1264, %v1270
        %v1272 = vcombine.low %v1216, %v1220
        %v1274 = vunpack.c.l.s4 1983009808
        %v1275 = vunpack.c.0.s8 %v1274
        %v1276 = vlaneseq
        %v1277 = vshrl.u32 %v1276, 7
        %v1278 = vsub.s32 %v1275, %v1277
        %v1279 = vrot.slane %v1272, %v1278
        %v1280 = vcombine.low %v1271, %v1279
        %v1282 = vunpack.c.l.s4 1934713408
        %v1283 = vunpack.c.0.s8 %v1282
        %v1284 = vlaneseq
        %v1285 = vshrl.u32 %v1284, 7
        %v1286 = vsub.s32 %v1283, %v1285
        %v1287 = vrot.slane %v1280, %v1286
        %v1288 = vcombine.high %v1287, 0
        %v1291 = vpack.i.b16 %v1287, %v1262
        %v1292 = vshrl.u32 %v1262, 16
        %v1293 = vshrl.u32 %v1287, 16
        %v1294 = vpack.i.b16 %v1293, %v1292
        %v1297 = vpack.i.b16 %v1288, %v1263
        %v1298 = vshrl.u32 %v1263, 16
        %v1299 = vshrl.u32 %v1288, 16
        %v1300 = vpack.i.b16 %v1299, %v1298
        %1301 = vxpose.xlu0.c.b16.start [1/8] %v1221, 128
        %1302 = vxpose.xlu0.c.b16.cont [2/8] 0, 128
        %1303 = vxpose.xlu0.c.b16.cont [3/8] 0, 128
        %1304 = vxpose.xlu0.c.b16.cont [4/8] 0, 128
        %1305 = vxpose.xlu0.c.b16.cont [5/8] 0, 128
        %1306 = vxpose.xlu0.c.b16.cont [6/8] 0, 128
        %1307 = vxpose.xlu0.c.b16.cont [7/8] 0, 128
        %1308 = vxpose.xlu0.c.b16.end [8/8] 0, 128
        %v1309 = vpop.trf.xlu0
        %v1310 = vpop.trf.xlu0
        %v1311 = vpop.trf.xlu0
        %v1312 = vpop.trf.xlu0
        %v1313 = vpop.trf.xlu0
        %v1314 = vpop.trf.xlu0
        %v1315 = vpop.trf.xlu0
        %v1316 = vpop.trf.xlu0
        %1317 = vxpose.xlu0.c.b16.start [1/8] %v1222, 128
        %1318 = vxpose.xlu0.c.b16.cont [2/8] 0, 128
        %1319 = vxpose.xlu0.c.b16.cont [3/8] 0, 128
        %1320 = vxpose.xlu0.c.b16.cont [4/8] 0, 128
        %1321 = vxpose.xlu0.c.b16.cont [5/8] 0, 128
        %1322 = vxpose.xlu0.c.b16.cont [6/8] 0, 128
        %1323 = vxpose.xlu0.c.b16.cont [7/8] 0, 128
        %1324 = vxpose.xlu0.c.b16.end [8/8] 0, 128
        %v1325 = vpop.trf.xlu0
        %v1326 = vpop.trf.xlu0
        %v1327 = vpop.trf.xlu0
        %v1328 = vpop.trf.xlu0
        %v1329 = vpop.trf.xlu0
        %v1330 = vpop.trf.xlu0
        %v1331 = vpop.trf.xlu0
        %v1332 = vpop.trf.xlu0
        %1333 = vxpose.xlu0.c.b16.start [1/8] %v1223, 128
        %1334 = vxpose.xlu0.c.b16.cont [2/8] 0, 128
        %1335 = vxpose.xlu0.c.b16.cont [3/8] 0, 128
        %1336 = vxpose.xlu0.c.b16.cont [4/8] 0, 128
        %1337 = vxpose.xlu0.c.b16.cont [5/8] 0, 128
        %1338 = vxpose.xlu0.c.b16.cont [6/8] 0, 128
        %1339 = vxpose.xlu0.c.b16.cont [7/8] 0, 128
        %1340 = vxpose.xlu0.c.b16.end [8/8] 0, 128
        %v1341 = vpop.trf.xlu0
        %v1342 = vpop.trf.xlu0
        %v1343 = vpop.trf.xlu0
        %v1344 = vpop.trf.xlu0
        %v1345 = vpop.trf.xlu0
        %v1346 = vpop.trf.xlu0
        %v1347 = vpop.trf.xlu0
        %v1348 = vpop.trf.xlu0
        %1349 = vxpose.xlu0.c.b16.start [1/8] %v1224, 128
        %1350 = vxpose.xlu0.c.b16.cont [2/8] 0, 128
        %1351 = vxpose.xlu0.c.b16.cont [3/8] 0, 128
        %1352 = vxpose.xlu0.c.b16.cont [4/8] 0, 128
        %1353 = vxpose.xlu0.c.b16.cont [5/8] 0, 128
        %1354 = vxpose.xlu0.c.b16.cont [6/8] 0, 128
        %1355 = vxpose.xlu0.c.b16.cont [7/8] 0, 128
        %1356 = vxpose.xlu0.c.b16.end [8/8] 0, 128
        %v1357 = vpop.trf.xlu0
        %v1358 = vpop.trf.xlu0
        %v1359 = vpop.trf.xlu0
        %v1360 = vpop.trf.xlu0
        %v1361 = vpop.trf.xlu0
        %v1362 = vpop.trf.xlu0
        %v1363 = vpop.trf.xlu0
        %v1364 = vpop.trf.xlu0
        %1365 = vxpose.xlu0.c.b16.start [1/8] %v1225, 128
        %1366 = vxpose.xlu0.c.b16.cont [2/8] 0, 128
        %1367 = vxpose.xlu0.c.b16.cont [3/8] 0, 128
        %1368 = vxpose.xlu0.c.b16.cont [4/8] 0, 128
        %1369 = vxpose.xlu0.c.b16.cont [5/8] 0, 128
        %1370 = vxpose.xlu0.c.b16.cont [6/8] 0, 128
        %1371 = vxpose.xlu0.c.b16.cont [7/8] 0, 128
        %1372 = vxpose.xlu0.c.b16.end [8/8] 0, 128
        %v1373 = vpop.trf.xlu0
        %v1374 = vpop.trf.xlu0
        %v1375 = vpop.trf.xlu0
        %v1376 = vpop.trf.xlu0
        %v1377 = vpop.trf.xlu0
        %v1378 = vpop.trf.xlu0
        %v1379 = vpop.trf.xlu0
        %v1380 = vpop.trf.xlu0
        %1381 = vxpose.xlu0.c.b16.start [1/8] %v1226, 128
        %1382 = vxpose.xlu0.c.b16.cont [2/8] 0, 128
        %1383 = vxpose.xlu0.c.b16.cont [3/8] 0, 128
        %1384 = vxpose.xlu0.c.b16.cont [4/8] 0, 128
        %1385 = vxpose.xlu0.c.b16.cont [5/8] 0, 128
        %1386 = vxpose.xlu0.c.b16.cont [6/8] 0, 128
        %1387 = vxpose.xlu0.c.b16.cont [7/8] 0, 128
        %1388 = vxpose.xlu0.c.b16.end [8/8] 0, 128
        %v1389 = vpop.trf.xlu0
        %v1390 = vpop.trf.xlu0
        %v1391 = vpop.trf.xlu0
        %v1392 = vpop.trf.xlu0
        %v1393 = vpop.trf.xlu0
        %v1394 = vpop.trf.xlu0
        %v1395 = vpop.trf.xlu0
        %v1396 = vpop.trf.xlu0
        %1397 = vxpose.xlu0.c.b16.start [1/8] %v1227, 128
        %1398 = vxpose.xlu0.c.b16.cont [2/8] 0, 128
        %1399 = vxpose.xlu0.c.b16.cont [3/8] 0, 128
        %1400 = vxpose.xlu0.c.b16.cont [4/8] 0, 128
        %1401 = vxpose.xlu0.c.b16.cont [5/8] 0, 128
        %1402 = vxpose.xlu0.c.b16.cont [6/8] 0, 128
        %1403 = vxpose.xlu0.c.b16.cont [7/8] 0, 128
        %1404 = vxpose.xlu0.c.b16.end [8/8] 0, 128
        %v1405 = vpop.trf.xlu0
        %v1406 = vpop.trf.xlu0
        %v1407 = vpop.trf.xlu0
        %v1408 = vpop.trf.xlu0
        %v1409 = vpop.trf.xlu0
        %v1410 = vpop.trf.xlu0
        %v1411 = vpop.trf.xlu0
        %v1412 = vpop.trf.xlu0
        %1413 = vxpose.xlu0.c.b16.start [1/8] %v1228, 128
        %1414 = vxpose.xlu0.c.b16.cont [2/8] 0, 128
        %1415 = vxpose.xlu0.c.b16.cont [3/8] 0, 128
        %1416 = vxpose.xlu0.c.b16.cont [4/8] 0, 128
        %1417 = vxpose.xlu0.c.b16.cont [5/8] 0, 128
        %1418 = vxpose.xlu0.c.b16.cont [6/8] 0, 128
        %1419 = vxpose.xlu0.c.b16.cont [7/8] 0, 128
        %1420 = vxpose.xlu0.c.b16.end [8/8] 0, 128
        %v1421 = vpop.trf.xlu0
        %v1422 = vpop.trf.xlu0
        %v1423 = vpop.trf.xlu0
        %v1424 = vpop.trf.xlu0
        %v1425 = vpop.trf.xlu0
        %v1426 = vpop.trf.xlu0
        %v1427 = vpop.trf.xlu0
        %v1428 = vpop.trf.xlu0
        %v1429 = vcombine.low %v1309, %v1373
        %v1431 = vunpack.c.l.s4 1983009808
        %v1432 = vunpack.c.0.s8 %v1431
        %v1433 = vlaneseq
        %v1434 = vshrl.u32 %v1433, 7
        %v1435 = vsub.s32 %v1432, %v1434
        %v1436 = vrot.slane %v1429, %v1435
        %v1437 = vcombine.low %v1341, %v1405
        %v1439 = vunpack.c.l.s4 1983009808
        %v1440 = vunpack.c.0.s8 %v1439
        %v1441 = vlaneseq
        %v1442 = vshrl.u32 %v1441, 7
        %v1443 = vsub.s32 %v1440, %v1442
        %v1444 = vrot.slane %v1437, %v1443
        %v1445 = vcombine.low %v1436, %v1444
        %v1446 = vcombine.high %v1436, %v1444
        %v1448 = vunpack.c.l.s4 1934713408
        %v1449 = vunpack.c.0.s8 %v1448
        %v1450 = vlaneseq
        %v1451 = vshrl.u32 %v1450, 7
        %v1452 = vsub.s32 %v1449, %v1451
        %v1453 = vrot.slane %v1445, %v1452
        %v1455 = vunpack.c.l.s4 1934713408
        %v1456 = vunpack.c.0.s8 %v1455
        %v1457 = vlaneseq
        %v1458 = vshrl.u32 %v1457, 7
        %v1459 = vsub.s32 %v1456, %v1458
        %v1460 = vrot.slane %v1446, %v1459
        %v1461 = vcombine.high %v1453, 0
        %v1462 = vcombine.high %v1460, 0
        %v1463 = vcombine.low %v1325, %v1389
        %v1465 = vunpack.c.l.s4 1983009808
        %v1466 = vunpack.c.0.s8 %v1465
        %v1467 = vlaneseq
        %v1468 = vshrl.u32 %v1467, 7
        %v1469 = vsub.s32 %v1466, %v1468
        %v1470 = vrot.slane %v1463, %v1469
        %v1471 = vcombine.low %v1357, %v1421
        %v1473 = vunpack.c.l.s4 1983009808
        %v1474 = vunpack.c.0.s8 %v1473
        %v1475 = vlaneseq
        %v1476 = vshrl.u32 %v1475, 7
        %v1477 = vsub.s32 %v1474, %v1476
        %v1478 = vrot.slane %v1471, %v1477
        %v1479 = vcombine.low %v1470, %v1478
        %v1480 = vcombine.high %v1470, %v1478
        %v1482 = vunpack.c.l.s4 1934713408
        %v1483 = vunpack.c.0.s8 %v1482
        %v1484 = vlaneseq
        %v1485 = vshrl.u32 %v1484, 7
        %v1486 = vsub.s32 %v1483, %v1485
        %v1487 = vrot.slane %v1479, %v1486
        %v1489 = vunpack.c.l.s4 1934713408
        %v1490 = vunpack.c.0.s8 %v1489
        %v1491 = vlaneseq
        %v1492 = vshrl.u32 %v1491, 7
        %v1493 = vsub.s32 %v1490, %v1492
        %v1494 = vrot.slane %v1480, %v1493
        %v1495 = vcombine.high %v1487, 0
        %v1496 = vcombine.high %v1494, 0
        %v1499 = vpack.i.b16 %v1487, %v1453
        %v1501 = vshrl.u32 %v1453, 16
        %v1502 = vshrl.u32 %v1487, 16
        %v1503 = vpack.i.b16 %v1502, %v1501
        %v1507 = vpack.i.b16 %v1495, %v1461
        %v1509 = vshrl.u32 %v1461, 16
        %v1510 = vshrl.u32 %v1495, 16
        %v1511 = vpack.i.b16 %v1510, %v1509
        %v1515 = vpack.i.b16 %v1494, %v1460
        %v1517 = vshrl.u32 %v1460, 16
        %v1518 = vshrl.u32 %v1494, 16
        %v1519 = vpack.i.b16 %v1518, %v1517
        %v1523 = vpack.i.b16 %v1496, %v1462
        %v1525 = vshrl.u32 %v1462, 16
        %v1526 = vshrl.u32 %v1496, 16
        %v1527 = vpack.i.b16 %v1526, %v1525
        %1529 = vxpose.xlu0.c.b16.start [1/8] %v1499, 128
        %1530 = vxpose.xlu0.c.b16.cont [2/8] 0, 128
        %1531 = vxpose.xlu0.c.b16.cont [3/8] 0, 128
        %1532 = vxpose.xlu0.c.b16.cont [4/8] 0, 128
        %1533 = vxpose.xlu0.c.b16.cont [5/8] 0, 128
        %1534 = vxpose.xlu0.c.b16.cont [6/8] 0, 128
        %1535 = vxpose.xlu0.c.b16.cont [7/8] 0, 128
        %1536 = vxpose.xlu0.c.b16.end [8/8] 0, 128
        %v1537 = vpop.trf.xlu0
        %v1538 = vpop.trf.xlu0
        %v1539 = vpop.trf.xlu0
        %v1540 = vpop.trf.xlu0
        %v1541 = vpop.trf.xlu0
        %v1542 = vpop.trf.xlu0
        %v1543 = vpop.trf.xlu0
        %v1544 = vpop.trf.xlu0
        %1545 = vxpose.xlu0.c.b16.start [1/8] %v1503, 128
        %1546 = vxpose.xlu0.c.b16.cont [2/8] 0, 128
        %1547 = vxpose.xlu0.c.b16.cont [3/8] 0, 128
        %1548 = vxpose.xlu0.c.b16.cont [4/8] 0, 128
        %1549 = vxpose.xlu0.c.b16.cont [5/8] 0, 128
        %1550 = vxpose.xlu0.c.b16.cont [6/8] 0, 128
        %1551 = vxpose.xlu0.c.b16.cont [7/8] 0, 128
        %1552 = vxpose.xlu0.c.b16.end [8/8] 0, 128
        %v1553 = vpop.trf.xlu0
        %v1554 = vpop.trf.xlu0
        %v1555 = vpop.trf.xlu0
        %v1556 = vpop.trf.xlu0
        %v1557 = vpop.trf.xlu0
        %v1558 = vpop.trf.xlu0
        %v1559 = vpop.trf.xlu0
        %v1560 = vpop.trf.xlu0
        %1561 = vxpose.xlu0.c.b16.start [1/8] %v1507, 128
        %1562 = vxpose.xlu0.c.b16.cont [2/8] 0, 128
        %1563 = vxpose.xlu0.c.b16.cont [3/8] 0, 128
        %1564 = vxpose.xlu0.c.b16.cont [4/8] 0, 128
        %1565 = vxpose.xlu0.c.b16.cont [5/8] 0, 128
        %1566 = vxpose.xlu0.c.b16.cont [6/8] 0, 128
        %1567 = vxpose.xlu0.c.b16.cont [7/8] 0, 128
        %1568 = vxpose.xlu0.c.b16.end [8/8] 0, 128
        %v1569 = vpop.trf.xlu0
        %v1570 = vpop.trf.xlu0
        %v1571 = vpop.trf.xlu0
        %v1572 = vpop.trf.xlu0
        %v1573 = vpop.trf.xlu0
        %v1574 = vpop.trf.xlu0
        %v1575 = vpop.trf.xlu0
        %v1576 = vpop.trf.xlu0
        %1577 = vxpose.xlu0.c.b16.start [1/8] %v1511, 128
        %1578 = vxpose.xlu0.c.b16.cont [2/8] 0, 128
        %1579 = vxpose.xlu0.c.b16.cont [3/8] 0, 128
        %1580 = vxpose.xlu0.c.b16.cont [4/8] 0, 128
        %1581 = vxpose.xlu0.c.b16.cont [5/8] 0, 128
        %1582 = vxpose.xlu0.c.b16.cont [6/8] 0, 128
        %1583 = vxpose.xlu0.c.b16.cont [7/8] 0, 128
        %1584 = vxpose.xlu0.c.b16.end [8/8] 0, 128
        %v1585 = vpop.trf.xlu0
        %v1586 = vpop.trf.xlu0
        %v1587 = vpop.trf.xlu0
        %v1588 = vpop.trf.xlu0
        %v1589 = vpop.trf.xlu0
        %v1590 = vpop.trf.xlu0
        %v1591 = vpop.trf.xlu0
        %v1592 = vpop.trf.xlu0
        %1593 = vxpose.xlu0.c.b16.start [1/8] %v1515, 128
        %1594 = vxpose.xlu0.c.b16.cont [2/8] 0, 128
        %1595 = vxpose.xlu0.c.b16.cont [3/8] 0, 128
        %1596 = vxpose.xlu0.c.b16.cont [4/8] 0, 128
        %1597 = vxpose.xlu0.c.b16.cont [5/8] 0, 128
        %1598 = vxpose.xlu0.c.b16.cont [6/8] 0, 128
        %1599 = vxpose.xlu0.c.b16.cont [7/8] 0, 128
        %1600 = vxpose.xlu0.c.b16.end [8/8] 0, 128
        %v1601 = vpop.trf.xlu0
        %v1602 = vpop.trf.xlu0
        %v1603 = vpop.trf.xlu0
        %v1604 = vpop.trf.xlu0
        %v1605 = vpop.trf.xlu0
        %v1606 = vpop.trf.xlu0
        %v1607 = vpop.trf.xlu0
        %v1608 = vpop.trf.xlu0
        %1609 = vxpose.xlu0.c.b16.start [1/8] %v1519, 128
        %1610 = vxpose.xlu0.c.b16.cont [2/8] 0, 128
        %1611 = vxpose.xlu0.c.b16.cont [3/8] 0, 128
        %1612 = vxpose.xlu0.c.b16.cont [4/8] 0, 128
        %1613 = vxpose.xlu0.c.b16.cont [5/8] 0, 128
        %1614 = vxpose.xlu0.c.b16.cont [6/8] 0, 128
        %1615 = vxpose.xlu0.c.b16.cont [7/8] 0, 128
        %1616 = vxpose.xlu0.c.b16.end [8/8] 0, 128
        %v1617 = vpop.trf.xlu0
        %v1618 = vpop.trf.xlu0
        %v1619 = vpop.trf.xlu0
        %v1620 = vpop.trf.xlu0
        %v1621 = vpop.trf.xlu0
        %v1622 = vpop.trf.xlu0
        %v1623 = vpop.trf.xlu0
        %v1624 = vpop.trf.xlu0
        %1625 = vxpose.xlu0.c.b16.start [1/8] %v1523, 128
        %1626 = vxpose.xlu0.c.b16.cont [2/8] 0, 128
        %1627 = vxpose.xlu0.c.b16.cont [3/8] 0, 128
        %1628 = vxpose.xlu0.c.b16.cont [4/8] 0, 128
        %1629 = vxpose.xlu0.c.b16.cont [5/8] 0, 128
        %1630 = vxpose.xlu0.c.b16.cont [6/8] 0, 128
        %1631 = vxpose.xlu0.c.b16.cont [7/8] 0, 128
        %1632 = vxpose.xlu0.c.b16.end [8/8] 0, 128
        %v1633 = vpop.trf.xlu0
        %v1634 = vpop.trf.xlu0
        %v1635 = vpop.trf.xlu0
        %v1636 = vpop.trf.xlu0
        %v1637 = vpop.trf.xlu0
        %v1638 = vpop.trf.xlu0
        %v1639 = vpop.trf.xlu0
        %v1640 = vpop.trf.xlu0
        %1641 = vxpose.xlu0.c.b16.start [1/8] %v1527, 128
        %1642 = vxpose.xlu0.c.b16.cont [2/8] 0, 128
        %1643 = vxpose.xlu0.c.b16.cont [3/8] 0, 128
        %1644 = vxpose.xlu0.c.b16.cont [4/8] 0, 128
        %1645 = vxpose.xlu0.c.b16.cont [5/8] 0, 128
        %1646 = vxpose.xlu0.c.b16.cont [6/8] 0, 128
        %1647 = vxpose.xlu0.c.b16.cont [7/8] 0, 128
        %1648 = vxpose.xlu0.c.b16.end [8/8] 0, 128
        %v1649 = vpop.trf.xlu0
        %v1650 = vpop.trf.xlu0
        %v1651 = vpop.trf.xlu0
        %v1652 = vpop.trf.xlu0
        %v1653 = vpop.trf.xlu0
        %v1654 = vpop.trf.xlu0
        %v1655 = vpop.trf.xlu0
        %v1656 = vpop.trf.xlu0
        %v1657 = vcombine.low %v1537, %v1601
        %v1659 = vunpack.c.l.s4 1983009808
        %v1660 = vunpack.c.0.s8 %v1659
        %v1661 = vlaneseq
        %v1662 = vshrl.u32 %v1661, 7
        %v1663 = vsub.s32 %v1660, %v1662
        %v1664 = vrot.slane %v1657, %v1663
        %v1665 = vcombine.low %v1569, %v1633
        %v1667 = vunpack.c.l.s4 1983009808
        %v1668 = vunpack.c.0.s8 %v1667
        %v1669 = vlaneseq
        %v1670 = vshrl.u32 %v1669, 7
        %v1671 = vsub.s32 %v1668, %v1670
        %v1672 = vrot.slane %v1665, %v1671
        %v1673 = vcombine.low %v1664, %v1672
        %v1675 = vunpack.c.l.s4 1934713408
        %v1676 = vunpack.c.0.s8 %v1675
        %v1677 = vlaneseq
        %v1678 = vshrl.u32 %v1677, 7
        %v1679 = vsub.s32 %v1676, %v1678
        %v1680 = vrot.slane %v1673, %v1679
        %v1681 = vcombine.high %v1680, 0
        %v1682 = vcombine.low %v1553, %v1617
        %v1684 = vunpack.c.l.s4 1983009808
        %v1685 = vunpack.c.0.s8 %v1684
        %v1686 = vlaneseq
        %v1687 = vshrl.u32 %v1686, 7
        %v1688 = vsub.s32 %v1685, %v1687
        %v1689 = vrot.slane %v1682, %v1688
        %v1690 = vcombine.low %v1585, %v1649
        %v1692 = vunpack.c.l.s4 1983009808
        %v1693 = vunpack.c.0.s8 %v1692
        %v1694 = vlaneseq
        %v1695 = vshrl.u32 %v1694, 7
        %v1696 = vsub.s32 %v1693, %v1695
        %v1697 = vrot.slane %v1690, %v1696
        %v1698 = vcombine.low %v1689, %v1697
        %v1700 = vunpack.c.l.s4 1934713408
        %v1701 = vunpack.c.0.s8 %v1700
        %v1702 = vlaneseq
        %v1703 = vshrl.u32 %v1702, 7
        %v1704 = vsub.s32 %v1701, %v1703
        %v1705 = vrot.slane %v1698, %v1704
        %v1706 = vcombine.high %v1705, 0
        %v1709 = vpack.i.b16 %v1705, %v1680
        %v1710 = vshrl.u32 %v1680, 16
        %v1711 = vshrl.u32 %v1705, 16
        %v1712 = vpack.i.b16 %v1711, %v1710
        %v1715 = vpack.i.b16 %v1706, %v1681
        %v1716 = vshrl.u32 %v1681, 16
        %v1717 = vshrl.u32 %v1706, 16
        %v1718 = vpack.i.b16 %v1717, %v1716
        %vm1719 = vcmask 64512
        %v1721 = vsel %vm1719, %v1291, 0
        %vm1723 = vcmask 1043456
        %v1725 = vsel %vm1723, %v1709, 0
        %1727 = vmatprep.subr.bf16.mxu0 0
        %1728 = vmatpush1.bf16.msra.mxu0 %v1725
        %1729 = vmatprep.subr.bf16.mxu0 0
        %1730 = vmatpush1.bf16.msra.mxu0 0
        %1731 = vmatprep.subr.bf16.mxu0 0
        %1732 = vmatpush1.bf16.msra.mxu0 0
        %1733 = vmatprep.subr.bf16.mxu0 0
        %1734 = vmatpush1.bf16.msra.mxu0 0
        %1735 = vmatprep.subr.bf16.mxu0 0
        %1736 = vmatpush1.bf16.msra.mxu0 0
        %1737 = vmatprep.subr.bf16.mxu0 0
        %1738 = vmatpush1.bf16.msra.mxu0 0
        %1739 = vmatprep.subr.bf16.mxu0 0
        %1740 = vmatpush1.bf16.msra.mxu0 0
        %1741 = vmatprep.subr.bf16.mxu0 0
        %1742 = vmatpush1.bf16.msra.mxu0 0
        %1743 = vmatprep.subr.bf16.mxu0 0
        %1744 = vmatpush1.bf16.msra.mxu0 0
        %1745 = vmatprep.subr.bf16.mxu0 0
        %1746 = vmatpush1.bf16.msra.mxu0 0
        %1747 = vmatprep.subr.bf16.mxu0 0
        %1748 = vmatpush1.bf16.msra.mxu0 0
        %1749 = vmatprep.subr.bf16.mxu0 0
        %1750 = vmatpush1.bf16.msra.mxu0 0
        %1751 = vmatprep.subr.bf16.mxu0 0
        %1752 = vmatpush1.bf16.msra.mxu0 0
        %1753 = vmatprep.subr.bf16.mxu0 0
        %1754 = vmatpush1.bf16.msra.mxu0 0
        %1755 = vmatprep.subr.bf16.mxu0 0
        %1756 = vmatpush1.bf16.msra.mxu0 0
        %1757 = vmatprep.subr.bf16.mxu0 0
        %1758 = vmatpush1.bf16.msra.mxu0 0
        %1759 = vmatprep.mubr.bf16.mxu0 0
        %1760 = vmatmul.mubr.bf16.gmra.mrb[0].mxu0 %v1721
        %v1761 = vpop.f32.mrb[0].mxu0
        %v1762 = vadd.f32 %v1238, %v1761
        %v1763 = vpop.f32.mrb[0].mxu0
        %v1764 = vpop.f32.mrb[0].mxu0
        %v1765 = vpop.f32.mrb[0].mxu0
        %1766 = vdwg.mxu0
        %v1768 = vsel %vm1719, %v1294, 0
        %v1771 = vsel %vm1723, %v1712, 0
        %1773 = vmatprep.subr.bf16.mxu0 0
        %1774 = vmatpush1.bf16.msra.mxu0 %v1771
        %1775 = vmatprep.subr.bf16.mxu0 0
        %1776 = vmatpush1.bf16.msra.mxu0 0
        %1777 = vmatprep.subr.bf16.mxu0 0
        %1778 = vmatpush1.bf16.msra.mxu0 0
        %1779 = vmatprep.subr.bf16.mxu0 0
        %1780 = vmatpush1.bf16.msra.mxu0 0
        %1781 = vmatprep.subr.bf16.mxu0 0
        %1782 = vmatpush1.bf16.msra.mxu0 0
        %1783 = vmatprep.subr.bf16.mxu0 0
        %1784 = vmatpush1.bf16.msra.mxu0 0
        %1785 = vmatprep.subr.bf16.mxu0 0
        %1786 = vmatpush1.bf16.msra.mxu0 0
        %1787 = vmatprep.subr.bf16.mxu0 0
        %1788 = vmatpush1.bf16.msra.mxu0 0
        %1789 = vmatprep.subr.bf16.mxu0 0
        %1790 = vmatpush1.bf16.msra.mxu0 0
        %1791 = vmatprep.subr.bf16.mxu0 0
        %1792 = vmatpush1.bf16.msra.mxu0 0
        %1793 = vmatprep.subr.bf16.mxu0 0
        %1794 = vmatpush1.bf16.msra.mxu0 0
        %1795 = vmatprep.subr.bf16.mxu0 0
        %1796 = vmatpush1.bf16.msra.mxu0 0
        %1797 = vmatprep.subr.bf16.mxu0 0
        %1798 = vmatpush1.bf16.msra.mxu0 0
        %1799 = vmatprep.subr.bf16.mxu0 0
        %1800 = vmatpush1.bf16.msra.mxu0 0
        %1801 = vmatprep.subr.bf16.mxu0 0
        %1802 = vmatpush1.bf16.msra.mxu0 0
        %1803 = vmatprep.subr.bf16.mxu0 0
        %1804 = vmatpush1.bf16.msra.mxu0 0
        %1805 = vmatprep.mubr.bf16.mxu0 0
        %1806 = vmatmul.mubr.bf16.gmra.mrb[0].mxu0 %v1768
        %v1807 = vpop.f32.mrb[0].mxu0
        %v1808 = vadd.f32 %v1238, %v1807
        %v1809 = vpop.f32.mrb[0].mxu0
        %v1810 = vpop.f32.mrb[0].mxu0
        %v1811 = vpop.f32.mrb[0].mxu0
        %1812 = vdwg.mxu0
        %v1814 = vsel %vm1719, %v1297, 0
        %v1817 = vsel %vm1723, %v1715, 0
        %1819 = vmatprep.subr.bf16.mxu0 0
        %1820 = vmatpush1.bf16.msra.mxu0 %v1817
        %1821 = vmatprep.subr.bf16.mxu0 0
        %1822 = vmatpush1.bf16.msra.mxu0 0
        %1823 = vmatprep.subr.bf16.mxu0 0
        %1824 = vmatpush1.bf16.msra.mxu0 0
        %1825 = vmatprep.subr.bf16.mxu0 0
        %1826 = vmatpush1.bf16.msra.mxu0 0
        %1827 = vmatprep.subr.bf16.mxu0 0
        %1828 = vmatpush1.bf16.msra.mxu0 0
        %1829 = vmatprep.subr.bf16.mxu0 0
        %1830 = vmatpush1.bf16.msra.mxu0 0
        %1831 = vmatprep.subr.bf16.mxu0 0
        %1832 = vmatpush1.bf16.msra.mxu0 0
        %1833 = vmatprep.subr.bf16.mxu0 0
        %1834 = vmatpush1.bf16.msra.mxu0 0
        %1835 = vmatprep.subr.bf16.mxu0 0
        %1836 = vmatpush1.bf16.msra.mxu0 0
        %1837 = vmatprep.subr.bf16.mxu0 0
        %1838 = vmatpush1.bf16.msra.mxu0 0
        %1839 = vmatprep.subr.bf16.mxu0 0
        %1840 = vmatpush1.bf16.msra.mxu0 0
        %1841 = vmatprep.subr.bf16.mxu0 0
        %1842 = vmatpush1.bf16.msra.mxu0 0
        %1843 = vmatprep.subr.bf16.mxu0 0
        %1844 = vmatpush1.bf16.msra.mxu0 0
        %1845 = vmatprep.subr.bf16.mxu0 0
        %1846 = vmatpush1.bf16.msra.mxu0 0
        %1847 = vmatprep.subr.bf16.mxu0 0
        %1848 = vmatpush1.bf16.msra.mxu0 0
        %1849 = vmatprep.subr.bf16.mxu0 0
        %1850 = vmatpush1.bf16.msra.mxu0 0
        %1851 = vmatprep.mubr.bf16.mxu0 0
        %1852 = vmatmul.mubr.bf16.gmra.mrb[0].mxu0 %v1814
        %v1853 = vpop.f32.mrb[0].mxu0
        %v1854 = vadd.f32 %v1238, %v1853
        %v1855 = vpop.f32.mrb[0].mxu0
        %v1856 = vpop.f32.mrb[0].mxu0
        %v1857 = vpop.f32.mrb[0].mxu0
        %1858 = vdwg.mxu0
        %v1860 = vsel %vm1719, %v1300, 0
        %v1863 = vsel %vm1723, %v1718, 0
        %1865 = vmatprep.subr.bf16.mxu0 0
        %1866 = vmatpush1.bf16.msra.mxu0 %v1863
        %1867 = vmatprep.subr.bf16.mxu0 0
        %1868 = vmatpush1.bf16.msra.mxu0 0
        %1869 = vmatprep.subr.bf16.mxu0 0
        %1870 = vmatpush1.bf16.msra.mxu0 0
        %1871 = vmatprep.subr.bf16.mxu0 0
        %1872 = vmatpush1.bf16.msra.mxu0 0
        %1873 = vmatprep.subr.bf16.mxu0 0
        %1874 = vmatpush1.bf16.msra.mxu0 0
        %1875 = vmatprep.subr.bf16.mxu0 0
        %1876 = vmatpush1.bf16.msra.mxu0 0
        %1877 = vmatprep.subr.bf16.mxu0 0
        %1878 = vmatpush1.bf16.msra.mxu0 0
        %1879 = vmatprep.subr.bf16.mxu0 0
        %1880 = vmatpush1.bf16.msra.mxu0 0
        %1881 = vmatprep.subr.bf16.mxu0 0
        %1882 = vmatpush1.bf16.msra.mxu0 0
        %1883 = vmatprep.subr.bf16.mxu0 0
        %1884 = vmatpush1.bf16.msra.mxu0 0
        %1885 = vmatprep.subr.bf16.mxu0 0
        %1886 = vmatpush1.bf16.msra.mxu0 0
        %1887 = vmatprep.subr.bf16.mxu0 0
        %1888 = vmatpush1.bf16.msra.mxu0 0
        %1889 = vmatprep.subr.bf16.mxu0 0
        %1890 = vmatpush1.bf16.msra.mxu0 0
        %1891 = vmatprep.subr.bf16.mxu0 0
        %1892 = vmatpush1.bf16.msra.mxu0 0
        %1893 = vmatprep.subr.bf16.mxu0 0
        %1894 = vmatpush1.bf16.msra.mxu0 0
        %1895 = vmatprep.subr.bf16.mxu0 0
        %1896 = vmatpush1.bf16.msra.mxu0 0
        %1897 = vmatprep.mubr.bf16.mxu0 0
        %1898 = vmatmul.mubr.bf16.gmra.mrb[0].mxu0 %v1860
        %v1899 = vpop.f32.mrb[0].mxu0
        %v1900 = vadd.f32 %v1238, %v1899
        %v1901 = vpop.f32.mrb[0].mxu0
        %v1902 = vpop.f32.mrb[0].mxu0
        %v1903 = vpop.f32.mrb[0].mxu0
        %1904 = vdwg.mxu0
        %v1905 = vsel %vm1719, %v1762, -inf
        %1906 = vmax.xlane.f32.xlu0 %v1905
        %v1907 = vpop.xlane.xlu0 %1906
        %v1908 = vsel %vm1719, %v1808, -inf
        %1909 = vmax.xlane.f32.xlu0 %v1908
        %v1910 = vpop.xlane.xlu0 %1909
        %v1911 = vsel %vm1719, %v1854, -inf
        %1912 = vmax.xlane.f32.xlu0 %v1911
        %v1913 = vpop.xlane.xlu0 %1912
        %v1914 = vsel %vm1719, %v1900, -inf
        %1915 = vmax.xlane.f32.xlu0 %v1914
        %v1916 = vpop.xlane.xlu0 %1915
        %v1917 = vsub.f32 -inf, %v1907
        %v1918 = vsub.f32 -inf, %v1910
        %v1919 = vsub.f32 -inf, %v1913
        %v1920 = vsub.f32 -inf, %v1916
        %v1921 = vmul.f32 %v1917, 1.442695
        %v1922 = vpow.pop %v1921
        %v1923 = vmul.f32 %v1918, 1.442695
        %v1924 = vpow.pop %v1923
        %v1925 = vmul.f32 %v1919, 1.442695
        %v1926 = vpow.pop %v1925
        %v1927 = vmul.f32 %v1920, 1.442695
        %v1928 = vpow.pop %v1927
        %v1929 = vsub.f32 %v1762, %v1907
        %v1930 = vsub.f32 %v1808, %v1910
        %v1931 = vsub.f32 %v1854, %v1913
        %v1932 = vsub.f32 %v1900, %v1916
        %v1933 = vmul.f32 %v1929, 1.442695
        %v1934 = vpow.pop %v1933
        %v1935 = vmul.f32 %v1930, 1.442695
        %v1936 = vpow.pop %v1935
        %v1937 = vmul.f32 %v1931, 1.442695
        %v1938 = vpow.pop %v1937
        %v1939 = vmul.f32 %v1932, 1.442695
        %v1940 = vpow.pop %v1939
        %v1941 = vmul.f32 %v1922, 0.0
        %v1942 = vmul.f32 %v1924, 0.0
        %v1943 = vmul.f32 %v1926, 0.0
        %v1944 = vmul.f32 %v1928, 0.0
        %v1945 = vsel %vm1719, %v1934, 0.0
        %1946 = vadd.xlane.f32.xlu0 %v1945
        %v1947 = vpop.xlane.xlu0 %1946
        %v1948 = vsel %vm1719, %v1936, 0.0
        %1949 = vadd.xlane.f32.xlu0 %v1948
        %v1950 = vpop.xlane.xlu0 %1949
        %v1951 = vsel %vm1719, %v1938, 0.0
        %1952 = vadd.xlane.f32.xlu0 %v1951
        %v1953 = vpop.xlane.xlu0 %1952
        %v1954 = vsel %vm1719, %v1940, 0.0
        %1955 = vadd.xlane.f32.xlu0 %v1954
        %v1956 = vpop.xlane.xlu0 %1955
        %v1957 = vadd.f32 %v1941, %v1947
        %v1958 = vadd.f32 %v1942, %v1950
        %v1959 = vadd.f32 %v1943, %v1953
        %v1960 = vadd.f32 %v1944, %v1956
        %v1961 = vpack.c.bf16 %v1934, %v1934
        %v1962 = vpack.c.bf16 %v1936, %v1936
        %v1963 = vpack.c.bf16 %v1938, %v1938
        %v1964 = vpack.c.bf16 %v1940, %v1940
        %v1965 = vcombine.low %v1229, %v1231
        %v1967 = vunpack.c.l.s4 1934713408
        %v1968 = vunpack.c.0.s8 %v1967
        %v1969 = vlaneseq
        %v1970 = vshrl.u32 %v1969, 7
        %v1971 = vsub.s32 %v1968, %v1970
        %v1972 = vrot.slane %v1965, %v1971
        %v1973 = vcombine.high %v1972, 0
        %v1974 = vcombine.low %v1230, %v1232
        %v1976 = vunpack.c.l.s4 1934713408
        %v1977 = vunpack.c.0.s8 %v1976
        %v1978 = vlaneseq
        %v1979 = vshrl.u32 %v1978, 7
        %v1980 = vsub.s32 %v1977, %v1979
        %v1981 = vrot.slane %v1974, %v1980
        %v1982 = vcombine.high %v1981, 0
        %v1983 = vcombine.low %v1233, %v1235
        %v1985 = vunpack.c.l.s4 1934713408
        %v1986 = vunpack.c.0.s8 %v1985
        %v1987 = vlaneseq
        %v1988 = vshrl.u32 %v1987, 7
        %v1989 = vsub.s32 %v1986, %v1988
        %v1990 = vrot.slane %v1983, %v1989
        %v1991 = vcombine.high %v1990, 0
        %v1992 = vcombine.low %v1234, %v1236
        %v1994 = vunpack.c.l.s4 1934713408
        %v1995 = vunpack.c.0.s8 %v1994
        %v1996 = vlaneseq
        %v1997 = vshrl.u32 %v1996, 7
        %v1998 = vsub.s32 %v1995, %v1997
        %v1999 = vrot.slane %v1992, %v1998
        %v2000 = vcombine.high %v1999, 0
        %v2003 = vpack.i.b16 %v1981, %v1972
        %v2004 = vshrl.u32 %v1972, 16
        %v2005 = vshrl.u32 %v1981, 16
        %v2006 = vpack.i.b16 %v2005, %v2004
        %v2009 = vpack.i.b16 %v1982, %v1973
        %v2010 = vshrl.u32 %v1973, 16
        %v2011 = vshrl.u32 %v1982, 16
        %v2012 = vpack.i.b16 %v2011, %v2010
        %v2015 = vpack.i.b16 %v1999, %v1990
        %v2016 = vshrl.u32 %v1990, 16
        %v2017 = vshrl.u32 %v1999, 16
        %v2018 = vpack.i.b16 %v2017, %v2016
        %v2021 = vpack.i.b16 %v2000, %v1991
        %v2022 = vshrl.u32 %v1991, 16
        %v2023 = vshrl.u32 %v2000, 16
        %v2024 = vpack.i.b16 %v2023, %v2022
        %v2025 = vcombine.low %v2003, %v2015
        %v2027 = vunpack.c.l.s4 1983009808
        %v2028 = vunpack.c.0.s8 %v2027
        %v2029 = vlaneseq
        %v2030 = vshrl.u32 %v2029, 7
        %v2031 = vsub.s32 %v2028, %v2030
        %v2032 = vrot.slane %v2025, %v2031
        %v2034 = vsel %vm1719, %v1961, 0
        %v2037 = vsel %vm1723, %v2032, 0
        %2039 = vmatprep.subr.bf16.mxu0 0
        %2040 = vmatpush1.bf16.msra.mxu0 %v2037
        %2041 = vmatprep.subr.bf16.mxu0 0
        %2042 = vmatpush1.bf16.msra.mxu0 0
        %2043 = vmatprep.subr.bf16.mxu0 0
        %2044 = vmatpush1.bf16.msra.mxu0 0
        %2045 = vmatprep.subr.bf16.mxu0 0
        %2046 = vmatpush1.bf16.msra.mxu0 0
        %2047 = vmatprep.subr.bf16.mxu0 0
        %2048 = vmatpush1.bf16.msra.mxu0 0
        %2049 = vmatprep.subr.bf16.mxu0 0
        %2050 = vmatpush1.bf16.msra.mxu0 0
        %2051 = vmatprep.subr.bf16.mxu0 0
        %2052 = vmatpush1.bf16.msra.mxu0 0
        %2053 = vmatprep.subr.bf16.mxu0 0
        %2054 = vmatpush1.bf16.msra.mxu0 0
        %2055 = vmatprep.subr.bf16.mxu0 0
        %2056 = vmatpush1.bf16.msra.mxu0 0
        %2057 = vmatprep.subr.bf16.mxu0 0
        %2058 = vmatpush1.bf16.msra.mxu0 0
        %2059 = vmatprep.subr.bf16.mxu0 0
        %2060 = vmatpush1.bf16.msra.mxu0 0
        %2061 = vmatprep.subr.bf16.mxu0 0
        %2062 = vmatpush1.bf16.msra.mxu0 0
        %2063 = vmatprep.subr.bf16.mxu0 0
        %2064 = vmatpush1.bf16.msra.mxu0 0
        %2065 = vmatprep.subr.bf16.mxu0 0
        %2066 = vmatpush1.bf16.msra.mxu0 0
        %2067 = vmatprep.subr.bf16.mxu0 0
        %2068 = vmatpush1.bf16.msra.mxu0 0
        %2069 = vmatprep.subr.bf16.mxu0 0
        %2070 = vmatpush1.bf16.msra.mxu0 0
        %2071 = vmatprep.mubr.bf16.mxu0 0
        %2072 = vmatmul.mubr.bf16.gmra.mrb[0].mxu0 %v2034
        %v2073 = vpop.f32.mrb[0].mxu0
        %v2074 = vadd.f32 0.0, %v2073
        %v2075 = vpop.f32.mrb[0].mxu0
        %v2076 = vpop.f32.mrb[0].mxu0
        %v2077 = vpop.f32.mrb[0].mxu0
        %2078 = vdwg.mxu0
        %v2079 = vcombine.low %v2006, %v2018
        %v2081 = vunpack.c.l.s4 1983009808
        %v2082 = vunpack.c.0.s8 %v2081
        %v2083 = vlaneseq
        %v2084 = vshrl.u32 %v2083, 7
        %v2085 = vsub.s32 %v2082, %v2084
        %v2086 = vrot.slane %v2079, %v2085
        %v2088 = vsel %vm1719, %v1962, 0
        %v2091 = vsel %vm1723, %v2086, 0
        %2093 = vmatprep.subr.bf16.mxu0 0
        %2094 = vmatpush1.bf16.msra.mxu0 %v2091
        %2095 = vmatprep.subr.bf16.mxu0 0
        %2096 = vmatpush1.bf16.msra.mxu0 0
        %2097 = vmatprep.subr.bf16.mxu0 0
        %2098 = vmatpush1.bf16.msra.mxu0 0
        %2099 = vmatprep.subr.bf16.mxu0 0
        %2100 = vmatpush1.bf16.msra.mxu0 0
        %2101 = vmatprep.subr.bf16.mxu0 0
        %2102 = vmatpush1.bf16.msra.mxu0 0
        %2103 = vmatprep.subr.bf16.mxu0 0
        %2104 = vmatpush1.bf16.msra.mxu0 0
        %2105 = vmatprep.subr.bf16.mxu0 0
        %2106 = vmatpush1.bf16.msra.mxu0 0
        %2107 = vmatprep.subr.bf16.mxu0 0
        %2108 = vmatpush1.bf16.msra.mxu0 0
        %2109 = vmatprep.subr.bf16.mxu0 0
        %2110 = vmatpush1.bf16.msra.mxu0 0
        %2111 = vmatprep.subr.bf16.mxu0 0
        %2112 = vmatpush1.bf16.msra.mxu0 0
        %2113 = vmatprep.subr.bf16.mxu0 0
        %2114 = vmatpush1.bf16.msra.mxu0 0
        %2115 = vmatprep.subr.bf16.mxu0 0
        %2116 = vmatpush1.bf16.msra.mxu0 0
        %2117 = vmatprep.subr.bf16.mxu0 0
        %2118 = vmatpush1.bf16.msra.mxu0 0
        %2119 = vmatprep.subr.bf16.mxu0 0
        %2120 = vmatpush1.bf16.msra.mxu0 0
        %2121 = vmatprep.subr.bf16.mxu0 0
        %2122 = vmatpush1.bf16.msra.mxu0 0
        %2123 = vmatprep.subr.bf16.mxu0 0
        %2124 = vmatpush1.bf16.msra.mxu0 0
        %2125 = vmatprep.mubr.bf16.mxu0 0
        %2126 = vmatmul.mubr.bf16.gmra.mrb[0].mxu0 %v2088
        %v2127 = vpop.f32.mrb[0].mxu0
        %v2128 = vadd.f32 0.0, %v2127
        %v2129 = vpop.f32.mrb[0].mxu0
        %v2130 = vpop.f32.mrb[0].mxu0
        %v2131 = vpop.f32.mrb[0].mxu0
        %2132 = vdwg.mxu0
        %v2133 = vcombine.low %v2009, %v2021
        %v2135 = vunpack.c.l.s4 1983009808
        %v2136 = vunpack.c.0.s8 %v2135
        %v2137 = vlaneseq
        %v2138 = vshrl.u32 %v2137, 7
        %v2139 = vsub.s32 %v2136, %v2138
        %v2140 = vrot.slane %v2133, %v2139
        %v2142 = vsel %vm1719, %v1963, 0
        %v2145 = vsel %vm1723, %v2140, 0
        %2147 = vmatprep.subr.bf16.mxu0 0
        %2148 = vmatpush1.bf16.msra.mxu0 %v2145
        %2149 = vmatprep.subr.bf16.mxu0 0
        %2150 = vmatpush1.bf16.msra.mxu0 0
        %2151 = vmatprep.subr.bf16.mxu0 0
        %2152 = vmatpush1.bf16.msra.mxu0 0
        %2153 = vmatprep.subr.bf16.mxu0 0
        %2154 = vmatpush1.bf16.msra.mxu0 0
        %2155 = vmatprep.subr.bf16.mxu0 0
        %2156 = vmatpush1.bf16.msra.mxu0 0
        %2157 = vmatprep.subr.bf16.mxu0 0
        %2158 = vmatpush1.bf16.msra.mxu0 0
        %2159 = vmatprep.subr.bf16.mxu0 0
        %2160 = vmatpush1.bf16.msra.mxu0 0
        %2161 = vmatprep.subr.bf16.mxu0 0
        %2162 = vmatpush1.bf16.msra.mxu0 0
        %2163 = vmatprep.subr.bf16.mxu0 0
        %2164 = vmatpush1.bf16.msra.mxu0 0
        %2165 = vmatprep.subr.bf16.mxu0 0
        %2166 = vmatpush1.bf16.msra.mxu0 0
        %2167 = vmatprep.subr.bf16.mxu0 0
        %2168 = vmatpush1.bf16.msra.mxu0 0
        %2169 = vmatprep.subr.bf16.mxu0 0
        %2170 = vmatpush1.bf16.msra.mxu0 0
        %2171 = vmatprep.subr.bf16.mxu0 0
        %2172 = vmatpush1.bf16.msra.mxu0 0
        %2173 = vmatprep.subr.bf16.mxu0 0
        %2174 = vmatpush1.bf16.msra.mxu0 0
        %2175 = vmatprep.subr.bf16.mxu0 0
        %2176 = vmatpush1.bf16.msra.mxu0 0
        %2177 = vmatprep.subr.bf16.mxu0 0
        %2178 = vmatpush1.bf16.msra.mxu0 0
        %2179 = vmatprep.mubr.bf16.mxu0 0
        %2180 = vmatmul.mubr.bf16.gmra.mrb[0].mxu0 %v2142
        %v2181 = vpop.f32.mrb[0].mxu0
        %v2182 = vadd.f32 0.0, %v2181
        %v2183 = vpop.f32.mrb[0].mxu0
        %v2184 = vpop.f32.mrb[0].mxu0
        %v2185 = vpop.f32.mrb[0].mxu0
        %2186 = vdwg.mxu0
        %v2187 = vcombine.low %v2012, %v2024
        %v2189 = vunpack.c.l.s4 1983009808
        %v2190 = vunpack.c.0.s8 %v2189
        %v2191 = vlaneseq
        %v2192 = vshrl.u32 %v2191, 7
        %v2193 = vsub.s32 %v2190, %v2192
        %v2194 = vrot.slane %v2187, %v2193
        %v2196 = vsel %vm1719, %v1964, 0
        %v2199 = vsel %vm1723, %v2194, 0
        %2201 = vmatprep.subr.bf16.mxu0 0
        %2202 = vmatpush1.bf16.msra.mxu0 %v2199
        %2203 = vmatprep.subr.bf16.mxu0 0
        %2204 = vmatpush1.bf16.msra.mxu0 0
        %2205 = vmatprep.subr.bf16.mxu0 0
        %2206 = vmatpush1.bf16.msra.mxu0 0
        %2207 = vmatprep.subr.bf16.mxu0 0
        %2208 = vmatpush1.bf16.msra.mxu0 0
        %2209 = vmatprep.subr.bf16.mxu0 0
        %2210 = vmatpush1.bf16.msra.mxu0 0
        %2211 = vmatprep.subr.bf16.mxu0 0
        %2212 = vmatpush1.bf16.msra.mxu0 0
        %2213 = vmatprep.subr.bf16.mxu0 0
        %2214 = vmatpush1.bf16.msra.mxu0 0
        %2215 = vmatprep.subr.bf16.mxu0 0
        %2216 = vmatpush1.bf16.msra.mxu0 0
        %2217 = vmatprep.subr.bf16.mxu0 0
        %2218 = vmatpush1.bf16.msra.mxu0 0
        %2219 = vmatprep.subr.bf16.mxu0 0
        %2220 = vmatpush1.bf16.msra.mxu0 0
        %2221 = vmatprep.subr.bf16.mxu0 0
        %2222 = vmatpush1.bf16.msra.mxu0 0
        %2223 = vmatprep.subr.bf16.mxu0 0
        %2224 = vmatpush1.bf16.msra.mxu0 0
        %2225 = vmatprep.subr.bf16.mxu0 0
        %2226 = vmatpush1.bf16.msra.mxu0 0
        %2227 = vmatprep.subr.bf16.mxu0 0
        %2228 = vmatpush1.bf16.msra.mxu0 0
        %2229 = vmatprep.subr.bf16.mxu0 0
        %2230 = vmatpush1.bf16.msra.mxu0 0
        %2231 = vmatprep.subr.bf16.mxu0 0
        %2232 = vmatpush1.bf16.msra.mxu0 0
        %2233 = vmatprep.mubr.bf16.mxu0 0
        %2234 = vmatmul.mubr.bf16.gmra.mrb[0].mxu0 %v2196
        %v2235 = vpop.f32.mrb[0].mxu0
        %v2236 = vadd.f32 0.0, %v2235
        %v2237 = vpop.f32.mrb[0].mxu0
        %v2238 = vpop.f32.mrb[0].mxu0
        %v2239 = vpop.f32.mrb[0].mxu0
        %2240 = vdwg.mxu0
        %v2241 = vadd.f32 %v1941, %v2074
        %v2242 = vadd.f32 %v1942, %v2128
        %v2243 = vadd.f32 %v1943, %v2182
        %v2244 = vadd.f32 %v1944, %v2236
        %v2245 = vrcp.pop %v1957
        %v2246 = vrcp.pop %v1958
        %v2247 = vrcp.pop %v1959
        %v2248 = vrcp.pop %v1960
        %v2249 = vmul.f32 %v2241, %v2245
        %v2250 = vmul.f32 %v2242, %v2246
        %v2251 = vmul.f32 %v2243, %v2247
        %v2252 = vmul.f32 %v2244, %v2248
        %v2253 = vcombine.low %v2249, %v2251
        %v2254 = vcombine.high %v2249, %v2251
        %v2256 = vunpack.c.l.s4 1983009808
        %v2257 = vunpack.c.0.s8 %v2256
        %v2258 = vlaneseq
        %v2259 = vshrl.u32 %v2258, 7
        %v2260 = vsub.s32 %v2257, %v2259
        %v2261 = vrot.slane %v2253, %v2260
        %v2263 = vunpack.c.l.s4 1983009808
        %v2264 = vunpack.c.0.s8 %v2263
        %v2265 = vlaneseq
        %v2266 = vshrl.u32 %v2265, 7
        %v2267 = vsub.s32 %v2264, %v2266
        %v2268 = vrot.slane %v2254, %v2267
        %v2269 = vcombine.low %v2250, %v2252
        %v2270 = vcombine.high %v2250, %v2252
        %v2272 = vunpack.c.l.s4 1983009808
        %v2273 = vunpack.c.0.s8 %v2272
        %v2274 = vlaneseq
        %v2275 = vshrl.u32 %v2274, 7
        %v2276 = vsub.s32 %v2273, %v2275
        %v2277 = vrot.slane %v2269, %v2276
        %v2279 = vunpack.c.l.s4 1983009808
        %v2280 = vunpack.c.0.s8 %v2279
        %v2281 = vlaneseq
        %v2282 = vshrl.u32 %v2281, 7
        %v2283 = vsub.s32 %v2280, %v2282
        %v2284 = vrot.slane %v2270, %v2283
        %v2285 = vcombine.low %v2261, %v2277
        %v2286 = vcombine.high %v2261, %v2277
        %v2288 = vunpack.c.l.s4 1934713408
        %v2289 = vunpack.c.0.s8 %v2288
        %v2290 = vlaneseq
        %v2291 = vshrl.u32 %v2290, 7
        %v2292 = vsub.s32 %v2289, %v2291
        %v2293 = vrot.slane %v2285, %v2292
        %v2295 = vunpack.c.l.s4 1934713408
        %v2296 = vunpack.c.0.s8 %v2295
        %v2297 = vlaneseq
        %v2298 = vshrl.u32 %v2297, 7
        %v2299 = vsub.s32 %v2296, %v2298
        %v2300 = vrot.slane %v2286, %v2299
        %v2301 = vcombine.low %v2268, %v2284
        %v2302 = vcombine.high %v2268, %v2284
        %v2304 = vunpack.c.l.s4 1934713408
        %v2305 = vunpack.c.0.s8 %v2304
        %v2306 = vlaneseq
        %v2307 = vshrl.u32 %v2306, 7
        %v2308 = vsub.s32 %v2305, %v2307
        %v2309 = vrot.slane %v2301, %v2308
        %v2311 = vunpack.c.l.s4 1934713408
        %v2312 = vunpack.c.0.s8 %v2311
        %v2313 = vlaneseq
        %v2314 = vshrl.u32 %v2313, 7
        %v2315 = vsub.s32 %v2312, %v2314
        %v2316 = vrot.slane %v2302, %v2315
        %v2317 = vcombine.high %v2293, 0.0
        %v2318 = vcombine.high %v2300, 0.0
        %v2319 = vcombine.high %v2309, 0.0
        %v2320 = vcombine.high %v2316, 0.0
        %v2321 = vcombine.low %v2293, %v2300
        %v2323 = vunpack.c.l.s4 1983009808
        %v2324 = vunpack.c.0.s8 %v2323
        %v2325 = vlaneseq
        %v2326 = vshrl.u32 %v2325, 7
        %v2327 = vsub.s32 %v2324, %v2326
        %v2328 = vrot.slane %v2321, %v2327
        %v2329 = vcombine.low %v2317, %v2318
        %v2331 = vunpack.c.l.s4 1983009808
        %v2332 = vunpack.c.0.s8 %v2331
        %v2333 = vlaneseq
        %v2334 = vshrl.u32 %v2333, 7
        %v2335 = vsub.s32 %v2332, %v2334
        %v2336 = vrot.slane %v2329, %v2335
        %v2337 = vcombine.low %v2309, %v2316
        %v2339 = vunpack.c.l.s4 1983009808
        %v2340 = vunpack.c.0.s8 %v2339
        %v2341 = vlaneseq
        %v2342 = vshrl.u32 %v2341, 7
        %v2343 = vsub.s32 %v2340, %v2342
        %v2344 = vrot.slane %v2337, %v2343
        %v2345 = vcombine.low %v2319, %v2320
        %v2347 = vunpack.c.l.s4 1983009808
        %v2348 = vunpack.c.0.s8 %v2347
        %v2349 = vlaneseq
        %v2350 = vshrl.u32 %v2349, 7
        %v2351 = vsub.s32 %v2348, %v2350
        %v2352 = vrot.slane %v2345, %v2351
        %v2353 = vcombine.low %v2328, %v2336
        %v2354 = vcombine.high %v2328, %v2336
        %v2356 = vunpack.c.l.s4 1934713408
        %v2357 = vunpack.c.0.s8 %v2356
        %v2358 = vlaneseq
        %v2359 = vshrl.u32 %v2358, 7
        %v2360 = vsub.s32 %v2357, %v2359
        %v2361 = vrot.slane %v2353, %v2360
        %v2363 = vunpack.c.l.s4 1934713408
        %v2364 = vunpack.c.0.s8 %v2363
        %v2365 = vlaneseq
        %v2366 = vshrl.u32 %v2365, 7
        %v2367 = vsub.s32 %v2364, %v2366
        %v2368 = vrot.slane %v2354, %v2367
        %v2369 = vcombine.low %v2344, %v2352
        %v2370 = vcombine.high %v2344, %v2352
        %v2372 = vunpack.c.l.s4 1934713408
        %v2373 = vunpack.c.0.s8 %v2372
        %v2374 = vlaneseq
        %v2375 = vshrl.u32 %v2374, 7
        %v2376 = vsub.s32 %v2373, %v2375
        %v2377 = vrot.slane %v2369, %v2376
        %v2379 = vunpack.c.l.s4 1934713408
        %v2380 = vunpack.c.0.s8 %v2379
        %v2381 = vlaneseq
        %v2382 = vshrl.u32 %v2381, 7
        %v2383 = vsub.s32 %v2380, %v2382
        %v2384 = vrot.slane %v2370, %v2383
        %v2385 = vcombine.low %v2361, %v2377
        %v2386 = vcombine.high %v2361, %v2377
        %v2387 = vcombine.low %v2368, %v2384
        %v2388 = vcombine.high %v2368, %v2384
        %2390 = vrot.lane.b32.xlu0 %v2386, 8
        %v2391 = vpop.permute.xlu0 %2390
        %2394 = vrot.lane.b32.xlu0 %v2387, 16
        %v2395 = vpop.permute.xlu0 %2394
        %2398 = vrot.lane.b32.xlu0 %v2388, 24
        %v2399 = vpop.permute.xlu0 %2398
        %v2401 = vsel %vm1719, %v2385, %v2391
        %vm2402 = vcmask 130048
        %v2403 = vsel %vm2402, %v2401, %v2395
        %vm2404 = vcmask 195584
        %v2405 = vsel %vm2404, %v2403, %v2399
        %v2406 = vpack.c.bf16 %v2405, %v2405
        %v2407 = vld [vmem:[#allocation10] sm:$0xf]
        %v2408 = vld [vmem:[#allocation10 + $0x4] sm:$0xf]
        %v2409 = vld [vmem:[#allocation10 + $0x8] sm:$0xf]
        %v2410 = vld [vmem:[#allocation10 + $0xc] sm:$0xf]
        %v2411 = vld [vmem:[#allocation12] sm:$0x1]
        %v2413 = vlaneseq
        %v2414 = vshrl.u32 %v2413, 7
        %v2415 = vsub.s32 0, %v2414
        %v2416 = vrot.slane %v2411, %v2415
        %v2422 = vunpack.c.l.b16 %v2407
        %v2423 = vunpack.c.l.b16 %v2408
        %v2424 = vunpack.c.l.b16 %v2409
        %v2425 = vunpack.c.l.b16 %v2410
        %v2426 = vpack.c.b16 %v2423, %v2422
        %v2427 = vpack.c.b16 %v2425, %v2424
        %v2431 = vsel %vm1038, %v2406, 0
        %2433 = vmatprep.subr.bf16.mxu0 0
        %2434 = vmatpush1.bf16.msra.mxu0 %v2426
        %2435 = vmatprep.subr.bf16.mxu0 0
        %2436 = vmatpush1.bf16.msra.mxu0 %v2427
        %2437 = vmatprep.subr.bf16.mxu0 0
        %2438 = vmatpush1.bf16.msra.mxu0 0
        %2439 = vmatprep.subr.bf16.mxu0 0
        %2440 = vmatpush1.bf16.msra.mxu0 0
        %2441 = vmatprep.subr.bf16.mxu0 0
        %2442 = vmatpush1.bf16.msra.mxu0 0
        %2443 = vmatprep.subr.bf16.mxu0 0
        %2444 = vmatpush1.bf16.msra.mxu0 0
        %2445 = vmatprep.subr.bf16.mxu0 0
        %2446 = vmatpush1.bf16.msra.mxu0 0
        %2447 = vmatprep.subr.bf16.mxu0 0
        %2448 = vmatpush1.bf16.msra.mxu0 0
        %2449 = vmatprep.subr.bf16.mxu0 0
        %2450 = vmatpush1.bf16.msra.mxu0 0
        %2451 = vmatprep.subr.bf16.mxu0 0
        %2452 = vmatpush1.bf16.msra.mxu0 0
        %2453 = vmatprep.subr.bf16.mxu0 0
        %2454 = vmatpush1.bf16.msra.mxu0 0
        %2455 = vmatprep.subr.bf16.mxu0 0
        %2456 = vmatpush1.bf16.msra.mxu0 0
        %2457 = vmatprep.subr.bf16.mxu0 0
        %2458 = vmatpush1.bf16.msra.mxu0 0
        %2459 = vmatprep.subr.bf16.mxu0 0
        %2460 = vmatpush1.bf16.msra.mxu0 0
        %2461 = vmatprep.subr.bf16.mxu0 0
        %2462 = vmatpush1.bf16.msra.mxu0 0
        %2463 = vmatprep.subr.bf16.mxu0 0
        %2464 = vmatpush1.bf16.msra.mxu0 0
        %2465 = vmatprep.mubr.bf16.mxu0 0
        %2466 = vmatmul.mubr.bf16.gmra.mrb[0].mxu0 %v2431
        %v2467 = vpop.f32.mrb[0].mxu0
        %v2468 = vadd.f32 %v2416, %v2467
        %v2469 = vpop.f32.mrb[0].mxu0
        %v2470 = vpop.f32.mrb[0].mxu0
        %v2471 = vpop.f32.mrb[0].mxu0
        %2472 = vdwg.mxu0
        %v2473 = vadd.f32 %v1037, %v2468
        %v2474 = vld [vmem:[%s16] sm:$0x1]
        %v2475 = vld [vmem:[%s17] sm:$0x1]
        %v2476 = vsel %vm1038, %v2473, 0.0
        %2477 = vadd.xlane.f32.xlu0 %v2476
        %v2478 = vpop.xlane.xlu0 %2477
        %v2479 = vmul.f32 %v2478, %v1042
        %v2480 = vsub.f32 %v2473, %v2479
        %v2481 = vmul.f32 %v2480, %v2480
        %v2482 = vsel %vm1038, %v2481, 0.0
        %2483 = vadd.xlane.f32.xlu0 %v2482
        %v2484 = vpop.xlane.xlu0 %2483
        %v2485 = vmul.f32 %v2484, %v1042
        %v2486 = vadd.f32 %v2485, 1e-06
        %v2487 = vrsqrt.pop %v2486
        %v2488 = vmul.f32 %v2480, %v2487
        %v2490 = vlaneseq
        %v2491 = vshrl.u32 %v2490, 7
        %v2492 = vsub.s32 0, %v2491
        %v2493 = vrot.slane %v2474, %v2492
        %v2495 = vmul.f32 %v2488, %v2493
        %v2497 = vlaneseq
        %v2498 = vshrl.u32 %v2497, 7
        %v2499 = vsub.s32 0, %v2498
        %v2500 = vrot.slane %v2475, %v2499
        %v2502 = vadd.f32 %v2495, %v2500
        %v2503 = vpack.c.bf16 %v2502, %v2502
        %v2504 = vld [vmem:[%s12] sm:$0xf]
        %v2505 = vld [vmem:[%s12 + $0x4] sm:$0xf]
        %v2506 = vld [vmem:[%s12 + $0x8] sm:$0xf]
        %v2507 = vld [vmem:[%s12 + $0xc] sm:$0xf]
        %v2508 = vld [vmem:[%s13] sm:$0x1]
        %v2510 = vlaneseq
        %v2511 = vshrl.u32 %v2510, 7
        %v2512 = vsub.s32 0, %v2511
        %v2513 = vrot.slane %v2508, %v2512
        %v2519 = vunpack.c.l.b16 %v2504
        %v2520 = vunpack.c.l.b16 %v2505
        %v2521 = vunpack.c.l.b16 %v2506
        %v2522 = vunpack.c.l.b16 %v2507
        %v2523 = vpack.c.b16 %v2520, %v2519
        %v2524 = vpack.c.b16 %v2522, %v2521
        %v2528 = vsel %vm1038, %v2503, 0
        %2530 = vmatprep.subr.bf16.mxu0 0
        %2531 = vmatpush1.bf16.msra.mxu0 %v2523
        %2532 = vmatprep.subr.bf16.mxu0 0
        %2533 = vmatpush1.bf16.msra.mxu0 %v2524
        %2534 = vmatprep.subr.bf16.mxu0 0
        %2535 = vmatpush1.bf16.msra.mxu0 0
        %2536 = vmatprep.subr.bf16.mxu0 0
        %2537 = vmatpush1.bf16.msra.mxu0 0
        %2538 = vmatprep.subr.bf16.mxu0 0
        %2539 = vmatpush1.bf16.msra.mxu0 0
        %2540 = vmatprep.subr.bf16.mxu0 0
        %2541 = vmatpush1.bf16.msra.mxu0 0
        %2542 = vmatprep.subr.bf16.mxu0 0
        %2543 = vmatpush1.bf16.msra.mxu0 0
        %2544 = vmatprep.subr.bf16.mxu0 0
        %2545 = vmatpush1.bf16.msra.mxu0 0
        %2546 = vmatprep.subr.bf16.mxu0 0
        %2547 = vmatpush1.bf16.msra.mxu0 0
        %2548 = vmatprep.subr.bf16.mxu0 0
        %2549 = vmatpush1.bf16.msra.mxu0 0
        %2550 = vmatprep.subr.bf16.mxu0 0
        %2551 = vmatpush1.bf16.msra.mxu0 0
        %2552 = vmatprep.subr.bf16.mxu0 0
        %2553 = vmatpush1.bf16.msra.mxu0 0
        %2554 = vmatprep.subr.bf16.mxu0 0
        %2555 = vmatpush1.bf16.msra.mxu0 0
        %2556 = vmatprep.subr.bf16.mxu0 0
        %2557 = vmatpush1.bf16.msra.mxu0 0
        %2558 = vmatprep.subr.bf16.mxu0 0
        %2559 = vmatpush1.bf16.msra.mxu0 0
        %2560 = vmatprep.subr.bf16.mxu0 0
        %2561 = vmatpush1.bf16.msra.mxu0 0
        %2562 = vmatprep.mubr.bf16.mxu0 0
        %2563 = vmatmul.mubr.bf16.gmra.mrb[0].mxu0 %v2528
        %v2564 = vpop.f32.mrb[0].mxu0
        %v2565 = vadd.f32 %v2513, %v2564
        %v2566 = vpop.f32.mrb[0].mxu0
        %v2567 = vpop.f32.mrb[0].mxu0
        %v2568 = vpop.f32.mrb[0].mxu0
        %2569 = vdwg.mxu0
        %v2570 = vmax.f32 %v2565, 0.0
        %v2571 = vpack.c.bf16 %v2570, %v2570
        %v2572 = vld [vmem:[%s14] sm:$0xf]
        %v2573 = vld [vmem:[%s14 + $0x4] sm:$0xf]
        %v2574 = vld [vmem:[%s14 + $0x8] sm:$0xf]
        %v2575 = vld [vmem:[%s14 + $0xc] sm:$0xf]
        %v2576 = vld [vmem:[%s14 + $0x10] sm:$0xf]
        %v2577 = vld [vmem:[%s14 + $0x14] sm:$0xf]
        %v2578 = vld [vmem:[%s14 + $0x18] sm:$0xf]
        %v2579 = vld [vmem:[%s14 + $0x1c] sm:$0xf]
        %v2580 = vld [vmem:[%s15] sm:$0x1]
        %v2582 = vlaneseq
        %v2583 = vshrl.u32 %v2582, 7
        %v2584 = vsub.s32 0, %v2583
        %v2585 = vrot.slane %v2580, %v2584
        %v2595 = vunpack.c.l.b16 %v2572
        %v2596 = vunpack.c.l.b16 %v2573
        %v2597 = vunpack.c.l.b16 %v2574
        %v2598 = vunpack.c.l.b16 %v2575
        %v2599 = vunpack.c.l.b16 %v2576
        %v2600 = vunpack.c.l.b16 %v2577
        %v2601 = vunpack.c.l.b16 %v2578
        %v2602 = vunpack.c.l.b16 %v2579
        %v2603 = vpack.c.b16 %v2596, %v2595
        %v2604 = vpack.c.b16 %v2598, %v2597
        %v2605 = vpack.c.b16 %v2600, %v2599
        %v2606 = vpack.c.b16 %v2602, %v2601
        %vm2611 = vcmask 523264
        %v2613 = vsel %vm2611, %v2571, 0
        %2615 = vmatprep.subr.bf16.mxu0 0
        %2616 = vmatpush1.bf16.msra.mxu0 %v2603
        %2617 = vmatprep.subr.bf16.mxu0 0
        %2618 = vmatpush1.bf16.msra.mxu0 %v2604
        %2619 = vmatprep.subr.bf16.mxu0 0
        %2620 = vmatpush1.bf16.msra.mxu0 %v2605
        %2621 = vmatprep.subr.bf16.mxu0 0
        %2622 = vmatpush1.bf16.msra.mxu0 %v2606
        %2623 = vmatprep.subr.bf16.mxu0 0
        %2624 = vmatpush1.bf16.msra.mxu0 0
        %2625 = vmatprep.subr.bf16.mxu0 0
        %2626 = vmatpush1.bf16.msra.mxu0 0
        %2627 = vmatprep.subr.bf16.mxu0 0
        %2628 = vmatpush1.bf16.msra.mxu0 0
        %2629 = vmatprep.subr.bf16.mxu0 0
        %2630 = vmatpush1.bf16.msra.mxu0 0
        %2631 = vmatprep.subr.bf16.mxu0 0
        %2632 = vmatpush1.bf16.msra.mxu0 0
        %2633 = vmatprep.subr.bf16.mxu0 0
        %2634 = vmatpush1.bf16.msra.mxu0 0
        %2635 = vmatprep.subr.bf16.mxu0 0
        %2636 = vmatpush1.bf16.msra.mxu0 0
        %2637 = vmatprep.subr.bf16.mxu0 0
        %2638 = vmatpush1.bf16.msra.mxu0 0
        %2639 = vmatprep.subr.bf16.mxu0 0
        %2640 = vmatpush1.bf16.msra.mxu0 0
        %2641 = vmatprep.subr.bf16.mxu0 0
        %2642 = vmatpush1.bf16.msra.mxu0 0
        %2643 = vmatprep.subr.bf16.mxu0 0
        %2644 = vmatpush1.bf16.msra.mxu0 0
        %2645 = vmatprep.subr.bf16.mxu0 0
        %2646 = vmatpush1.bf16.msra.mxu0 0
        %2647 = vmatprep.mubr.bf16.mxu0 0
        %2648 = vmatmul.mubr.bf16.gmra.mrb[0].mxu0 %v2613
        %v2649 = vpop.f32.mrb[0].mxu0
        %v2650 = vadd.f32 %v2585, %v2649
        %v2651 = vpop.f32.mrb[0].mxu0
        %v2652 = vpop.f32.mrb[0].mxu0
        %v2653 = vpop.f32.mrb[0].mxu0
        %2654 = vdwg.mxu0
        %v2655 = vadd.f32 %v2473, %v2650
        %2656 = vst.msk [vmem:[%s674] sm:$0xff] %vm1038, %v2655
        %s2657 = sand.u32 %s449, 1
        %s2658 = scalar_lea.sflag [#allocation6], %s2657
        %s2659 = sand.u32 %s449, 1
        %s2660 = smul.addr %s2659, 8
        %s2661 = scalar_lea.vmem [#allocation13], %s2660
        // Predicated region
        $region117: #{tpu_custom_call.1} parent=91 // pred_check
          %p2662 = pneg %p459
        $region118: #{tpu_custom_call.1} parent=91 // pred_check_branch
          %2664 = sbr.rel (%p2662) target = $region120
        $region119: #{tpu_custom_call.1} parent=91 // pred_region
          %s2666 = ssub.s32 128, 128
          %2667 = vsyncadd %s2658, %s2666
          %s2668 = sadd.s32 %s42, %s41
          %s2669 = smul.addr %s2668, 128
          %s2670 = scalar_lea.hbm %s18, %s2669
          %s2672 = sshll.u32 %s2661, 4
          %s2673 = int_to_ptr.vmem [resolvable:$true] %s2672
          %2675 = dma.vmem_to_hbm [thread:$0]  %s2673, 128, %s2670, %s2658
        $region120: #{tpu_custom_call.1} parent=91 // pred_fallthru
          _
      $region92: #{tpu_custom_call.1} parent=5 // pred_fallthru
        _
      %p2676 = scmp.le.s32.totalorder 2, %s32
      // Predicated region
      $region121: #{tpu_custom_call.1} parent=5 // pred_check
        %p2677 = pneg %p2676
      $region122: #{tpu_custom_call.1} parent=5 // pred_check_branch
        %2679 = sbr.rel (%p2677) target = $region124
      $region123: #{tpu_custom_call.1} parent=5 // pred_region
        %s2680 = ssub.s32 %s32, 2
        // Predicated region
        $region125: #{tpu_custom_call.1} parent=123 // pred_check
          %p2681 = pneg %p465
        $region126: #{tpu_custom_call.1} parent=123 // pred_check_branch
          %2683 = sbr.rel (%p2681) target = $region128
        $region127: #{tpu_custom_call.1} parent=123 // pred_region
          %s2684 = sand.u32 %s450, 1
          %s2685 = scalar_lea.sflag [#allocation6], %s2684
          %s2686 = sand.u32 %s450, 1
          %s2687 = smul.addr %s2686, 8
          %s2688 = scalar_lea.vmem [#allocation13], %s2687
          %2689 = dma.done %s2685, 128
        $region128: #{tpu_custom_call.1} parent=123 // pred_fallthru
          _
      $region124: #{tpu_custom_call.1} parent=5 // pred_fallthru
        _
    $region6: #{tpu_custom_call.1} parent=1 // loop_footer
      %s36 = sadd.s32 1, %s32
    $region7: #{tpu_custom_call.1} parent=1 // loop_footer_branch
      %31 = sbr.rel target = $region3
    $region8: #{tpu_custom_call.1} parent=1 // loop_exit
      _
    %2690 = vsyncpa [#allocation5], 1
    %s2691 = scalar_lea.sflag [#allocation5], 1
    %2692 = vsyncpa %s2691, 1
    %2693 = vsyncpa [#allocation8], 1
    %2694 = vsyncpa [#allocation11], 1
    %2695 = vsyncpa [#allocation6], 1
    %s2696 = scalar_lea.sflag [#allocation6], 1
    %2697 = vsyncpa %s2696, 1

</llo_original>
